<compile_context>
chip_gen: v7x
topology: tpu7x:2x2x1
jax: 0.10.0
libtpu: 0.0.40
codegen_flags: <defaults>
</compile_context>

<pallas_src>
import functools

import jax
import jax.numpy as jnp
from jax import lax
from jax.experimental import pallas as pl
from jax.experimental.pallas import tpu as pltpu


def _decoder_kernel(gx_ref, whh_ref, wout_ref, bout_ref, h0_ref, c0_ref,
                    pred_ref, hout_ref, cout_ref,
                    h_carry, c_carry, h_slab,
                    *, hidden_size, chunk_len):
    H = hidden_size
    TC = chunk_len
    B = h_carry.shape[0]
    P = pred_ref.shape[2]
    c_idx = pl.program_id(0)

    # Initialize the recurrent state from (hidden, cell) on the first chunk.
    @pl.when(c_idx == 0)
    def _():
        h_carry[...] = h0_ref[...].astype(jnp.float32)
        c_carry[...] = c0_ref[...].astype(jnp.float32)

    # Hoist the recurrent weight load / bias out of the time loop.
    whh = whh_ref[...].astype(jnp.float32)           # (H, 4H)

    def step(t, carry):
        h, c = carry
        # gates_x[t] was precomputed (with both biases fused); only the
        # h_{t-1} @ W_hh^T matmul sits on the serial critical path.
        gates = gx_ref[t].astype(jnp.float32) + jnp.dot(
            h, whh, preferred_element_type=jnp.float32)          # (B, 4H)
        i_g = jax.nn.sigmoid(gates[:, 0 * H:1 * H])
        f_g = jax.nn.sigmoid(gates[:, 1 * H:2 * H])
        g_g = jnp.tanh(gates[:, 2 * H:3 * H])
        o_g = jax.nn.sigmoid(gates[:, 3 * H:4 * H])
        c = f_g * c + i_g * g_g
        h = o_g * jnp.tanh(c)
        h_slab[t] = h                                            # stage for batched proj
        return (h, c)

    h_fin, c_fin = lax.fori_loop(0, TC, step,
                                 (h_carry[...], c_carry[...]),
                                 unroll=True)
    h_carry[...] = h_fin
    c_carry[...] = c_fin

    # Batched output projection for the whole chunk: one MXU matmul + one
    # bulk (lane-dense) store instead of TC tiny masked stores.
    hs = h_slab[...].reshape(TC * B, H)
    preds = jnp.dot(hs, wout_ref[...].astype(jnp.float32),
                    preferred_element_type=jnp.float32) + bout_ref[...]
    pred_ref[...] = preds.reshape(TC, B, P).astype(pred_ref.dtype)

    # Final hidden / cell state: write only once, on the last chunk.
    @pl.when(c_idx == pl.num_programs(0) - 1)
    def _():
        hout_ref[...] = h_fin.astype(hout_ref.dtype)
        cout_ref[...] = c_fin.astype(cout_ref.dtype)


def _chunk_len(T, max_chunk=32):
    """Largest divisor of T that is <= max_chunk (so chunks tile T exactly)."""
    tc = min(T, max_chunk)
    while T % tc != 0:
        tc -= 1
    return tc


def decoder_forward(x, hidden, cell, params):
    """x: (B, T, H), hidden/cell: (1, B, H). Returns (preds (B,T,P), hidden, cell)."""
    w_ih, w_hh, b_ih, b_hh, w_out, b_out = params
    B, T, H = x.shape
    P = w_out.shape[0]
    tc = _chunk_len(T)
    n_chunks = T // tc

    # Hoisted input projection: one large matmul, both LSTM biases fused,
    # produced directly in time-major layout (T, B, 4H).
    gx_tm = (jnp.einsum('bth,gh->tbg',
                        x.astype(jnp.float32), w_ih.astype(jnp.float32))
             + (b_ih + b_hh).astype(jnp.float32))                # (T, B, 4H)

    whh_t = w_hh.T.astype(jnp.float32)               # (H, 4H)
    wout_t = w_out.T.astype(jnp.float32)             # (H, P)
    bout = b_out.reshape(1, P).astype(jnp.float32)   # (1, P)
    h0 = hidden[0]                                   # (B, H)
    c0 = cell[0]                                     # (B, H)

    kernel = functools.partial(_decoder_kernel, hidden_size=H, chunk_len=tc)

    preds_tm, h_n, c_n = pl.pallas_call(
        kernel,
        out_shape=(jax.ShapeDtypeStruct((T, B, P), x.dtype),
                   jax.ShapeDtypeStruct((B, H), x.dtype),
                   jax.ShapeDtypeStruct((B, H), x.dtype)),
        grid_spec=pltpu.PrefetchScalarGridSpec(
            num_scalar_prefetch=0,
            grid=(n_chunks,),
            in_specs=[
                pl.BlockSpec((tc, B, 4 * H), lambda c: (c, 0, 0)),   # gates_x chunk
                pl.BlockSpec((H, 4 * H), lambda c: (0, 0)),          # W_hh^T
                pl.BlockSpec((H, P), lambda c: (0, 0)),              # W_out^T
                pl.BlockSpec((1, P), lambda c: (0, 0)),              # b_out
                pl.BlockSpec((B, H), lambda c: (0, 0)),              # h0
                pl.BlockSpec((B, H), lambda c: (0, 0)),              # c0
            ],
            out_specs=[
                pl.BlockSpec((tc, B, P), lambda c: (c, 0, 0)),       # predictions chunk
                pl.BlockSpec((B, H), lambda c: (0, 0)),              # final hidden
                pl.BlockSpec((B, H), lambda c: (0, 0)),              # final cell
            ],
            scratch_shapes=[pltpu.VMEM((B, H), jnp.float32),         # h carry
                            pltpu.VMEM((B, H), jnp.float32),         # c carry
                            pltpu.VMEM((tc, B, H), jnp.float32)],    # h slab (per chunk)
        ),
        compiler_params=pltpu.CompilerParams(
            dimension_semantics=("arbitrary",)),                     # time is sequential
    )(gx_tm, whh_t, wout_t, bout, h0, c0)

    predictions = jnp.transpose(preds_tm, (1, 0, 2))                 # (B, T, P)
    return predictions, h_n[None], c_n[None]


def decoder_reference(x, hidden, cell, params):
    """Pure-JAX reference matching torch.nn.LSTM(batch_first=True) + Linear."""
    w_ih, w_hh, b_ih, b_hh, w_out, b_out = params
    B, T, H = x.shape
    h0, c0 = hidden[0], cell[0]

    def step(carry, x_t):
        h, c = carry
        gates = x_t @ w_ih.T + b_ih + h @ w_hh.T + b_hh
        i = jax.nn.sigmoid(gates[:, 0 * H:1 * H])
        f = jax.nn.sigmoid(gates[:, 1 * H:2 * H])
        g = jnp.tanh(gates[:, 2 * H:3 * H])
        o = jax.nn.sigmoid(gates[:, 3 * H:4 * H])
        c = f * c + i * g
        h = o * jnp.tanh(c)
        return (h, c), h

    (h_n, c_n), hs = jax.lax.scan(step, (h0, c0), jnp.transpose(x, (1, 0, 2)))
    outputs = jnp.transpose(hs, (1, 0, 2))                          # (B, T, H)
    predictions = outputs @ w_out.T + b_out
    return predictions, h_n[None], c_n[None]


def init_params(key, hidden_size, output_size):
    """Deterministic init with the same shapes as the PyTorch module."""
    H, P = hidden_size, output_size
    k = 1.0 / jnp.sqrt(jnp.float32(H))
    keys = jax.random.split(key, 6)
    w_ih = jax.random.uniform(keys[0], (4 * H, H), jnp.float32, -k, k)
    w_hh = jax.random.uniform(keys[1], (4 * H, H), jnp.float32, -k, k)
    b_ih = jax.random.uniform(keys[2], (4 * H,), jnp.float32, -k, k)
    b_hh = jax.random.uniform(keys[3], (4 * H,), jnp.float32, -k, k)
    w_out = jax.random.uniform(keys[4], (P, H), jnp.float32, -k, k)
    b_out = jax.random.uniform(keys[5], (P,), jnp.float32, -k, k)
    return (w_ih, w_hh, b_ih, b_hh, w_out, b_out)


if __name__ == "__main__":
    B, T, H, P = 2, 8, 32, 16          # batch, seq, hidden_size, output_size

    key = jax.random.PRNGKey(0)
    k_x, k_h, k_c, k_p = jax.random.split(key, 4)
    x = jax.random.normal(k_x, (B, T, H), jnp.float32)
    hidden = jax.random.normal(k_h, (1, B, H), jnp.float32)
    cell = jax.random.normal(k_c, (1, B, H), jnp.float32)
    params = init_params(k_p, H, P)

    fwd = jax.jit(functools.partial(decoder_forward, params=params))
    preds, h_n, c_n = fwd(x, hidden, cell)
    jax.block_until_ready((preds, h_n, c_n))

    # Verify against the pure-JAX reference of the PyTorch semantics.
    preds_ref, h_ref, c_ref = decoder_reference(x, hidden, cell, params)
    assert preds.shape == (B, T, P) and h_n.shape == (1, B, H) and c_n.shape == (1, B, H)
    assert jnp.allclose(preds, preds_ref, atol=1e-5, rtol=1e-5)
    assert jnp.allclose(h_n, h_ref, atol=1e-5, rtol=1e-5)
    assert jnp.allclose(c_n, c_ref, atol=1e-5, rtol=1e-5)

    print("KERNEL_OK")
</pallas_src>

<mosaic_0001>
module attributes {stable_mosaic.version = 11 : i64} {
  func.func @_decoder_kernel(%arg0: i32, %arg1: memref<8x2x128xf32, #tpu.memory_space<vmem>>, %arg2: memref<32x128xf32, #tpu.memory_space<vmem>>, %arg3: memref<32x16xf32, #tpu.memory_space<vmem>>, %arg4: memref<1x16xf32, #tpu.memory_space<vmem>>, %arg5: memref<2x32xf32, #tpu.memory_space<vmem>>, %arg6: memref<2x32xf32, #tpu.memory_space<vmem>>, %arg7: memref<8x2x16xf32, #tpu.memory_space<vmem>>, %arg8: memref<2x32xf32, #tpu.memory_space<vmem>>, %arg9: memref<2x32xf32, #tpu.memory_space<vmem>>, %arg10: memref<2x32xf32, #tpu.memory_space<vmem>>, %arg11: memref<2x32xf32, #tpu.memory_space<vmem>>, %arg12: memref<8x2x32xf32, #tpu.memory_space<vmem>>) attributes {dimension_semantics = [#tpu.dimension_semantics<arbitrary>], iteration_bounds = array<i64: 1>, scalar_prefetch = 0 : i64, scratch_operands = 3 : i64, tpu.core_type = #tpu.core_type<tc>, window_params = [{transform_indices = @transform_0, window_bounds = array<i64: 8, 2, 128>}, {pipeline_mode = #tpu.pipeline_mode<synchronous>, transform_indices = @transform_1, window_bounds = array<i64: 32, 128>}, {pipeline_mode = #tpu.pipeline_mode<synchronous>, transform_indices = @transform_2, window_bounds = array<i64: 32, 16>}, {pipeline_mode = #tpu.pipeline_mode<synchronous>, transform_indices = @transform_3, window_bounds = array<i64: 1, 16>}, {pipeline_mode = #tpu.pipeline_mode<synchronous>, transform_indices = @transform_4, window_bounds = array<i64: 2, 32>}, {pipeline_mode = #tpu.pipeline_mode<synchronous>, transform_indices = @transform_5, window_bounds = array<i64: 2, 32>}, {transform_indices = @transform_6, window_bounds = array<i64: 8, 2, 16>}, {pipeline_mode = #tpu.pipeline_mode<synchronous>, transform_indices = @transform_7, window_bounds = array<i64: 2, 32>}, {pipeline_mode = #tpu.pipeline_mode<synchronous>, transform_indices = @transform_8, window_bounds = array<i64: 2, 32>}]} {
    %c0_i32 = arith.constant 0 : i32
    %0 = arith.cmpi eq, %arg0, %c0_i32 : i32
    %1 = arith.extui %0 : i1 to i32
    %c0_i32_0 = arith.constant 0 : i32
    %2 = arith.cmpi ne, %1, %c0_i32_0 : i32
    scf.if %2 {
      %c0_87 = arith.constant 0 : index
      %c0_88 = arith.constant 0 : index
      %292 = vector.load %arg5[%c0_87, %c0_88] : memref<2x32xf32, #tpu.memory_space<vmem>>, vector<2x32xf32>
      %c0_89 = arith.constant 0 : index
      %c0_90 = arith.constant 0 : index
      %293 = vector.load %arg10[%c0_89, %c0_90] : memref<2x32xf32, #tpu.memory_space<vmem>>, vector<2x32xf32>
      tpu.vector_store %arg10[%c0_89, %c0_90], %292 {strides = array<i32>} : memref<2x32xf32, #tpu.memory_space<vmem>>, vector<2x32xf32>,
      %c0_91 = arith.constant 0 : index
      %c0_92 = arith.constant 0 : index
      %294 = vector.load %arg6[%c0_91, %c0_92] : memref<2x32xf32, #tpu.memory_space<vmem>>, vector<2x32xf32>
      %c0_93 = arith.constant 0 : index
      %c0_94 = arith.constant 0 : index
      %295 = vector.load %arg11[%c0_93, %c0_94] : memref<2x32xf32, #tpu.memory_space<vmem>>, vector<2x32xf32>
      tpu.vector_store %arg11[%c0_93, %c0_94], %294 {strides = array<i32>} : memref<2x32xf32, #tpu.memory_space<vmem>>, vector<2x32xf32>,
    } else {
    }
    %c0 = arith.constant 0 : index
    %c0_1 = arith.constant 0 : index
    %3 = vector.load %arg2[%c0, %c0_1] : memref<32x128xf32, #tpu.memory_space<vmem>>, vector<32x128xf32>
    %c0_2 = arith.constant 0 : index
    %c0_3 = arith.constant 0 : index
    %4 = vector.load %arg10[%c0_2, %c0_3] : memref<2x32xf32, #tpu.memory_space<vmem>>, vector<2x32xf32>
    %c0_4 = arith.constant 0 : index
    %c0_5 = arith.constant 0 : index
    %5 = vector.load %arg11[%c0_4, %c0_5] : memref<2x32xf32, #tpu.memory_space<vmem>>, vector<2x32xf32>
    %c0_i32_6 = arith.constant 0 : i32
    %6 = arith.index_cast %c0_i32_6 : i32 to index
    %c0_7 = arith.constant 0 : index
    %c0_8 = arith.constant 0 : index
    %7 = vector.load %arg1[%6, %c0_7, %c0_8] : memref<8x2x128xf32, #tpu.memory_space<vmem>>, vector<1x2x128xf32>
    %8 = vector.shape_cast %7 : vector<1x2x128xf32> to vector<2x128xf32>
    %cst = arith.constant dense<0.000000e+00> : vector<2x128xf32>
    %9 = tpu.matmul %4, %3, %cst {dimension_numbers = #tpu.dot_dimension_numbers<[1], [0], [0], [1], [0, 0, 1, 1], [], []>} : vector<2x32xf32>, vector<32x128xf32>, vector<2x128xf32> -> vector<2x128xf32>
    %10 = arith.addf %8, %9 : vector<2x128xf32>
    %11 = vector.extract_strided_slice %10 {offsets = [0, 0], sizes = [2, 32], strides = [1, 1]} : vector<2x128xf32> to vector<2x32xf32>
    %12 = arith.negf %11 : vector<2x32xf32>
    %13 = math.exp %12 : vector<2x32xf32>
    %cst_9 = arith.constant 1.000000e+00 : f32
    %14 = vector.broadcast %cst_9 : f32 to vector<2x32xf32>
    %15 = arith.addf %14, %13 : vector<2x32xf32>
    %16 = arith.divf %14, %15 : vector<2x32xf32>
    %17 = vector.extract_strided_slice %10 {offsets = [0, 32], sizes = [2, 32], strides = [1, 1]} : vector<2x128xf32> to vector<2x32xf32>
    %18 = arith.negf %17 : vector<2x32xf32>
    %19 = math.exp %18 : vector<2x32xf32>
    %cst_10 = arith.constant 1.000000e+00 : f32
    %20 = vector.broadcast %cst_10 : f32 to vector<2x32xf32>
    %21 = arith.addf %20, %19 : vector<2x32xf32>
    %22 = arith.divf %20, %21 : vector<2x32xf32>
    %23 = vector.extract_strided_slice %10 {offsets = [0, 64], sizes = [2, 32], strides = [1, 1]} : vector<2x128xf32> to vector<2x32xf32>
    %24 = math.tanh %23 : vector<2x32xf32>
    %25 = vector.extract_strided_slice %10 {offsets = [0, 96], sizes = [2, 32], strides = [1, 1]} : vector<2x128xf32> to vector<2x32xf32>
    %26 = arith.negf %25 : vector<2x32xf32>
    %27 = math.exp %26 : vector<2x32xf32>
    %cst_11 = arith.constant 1.000000e+00 : f32
    %28 = vector.broadcast %cst_11 : f32 to vector<2x32xf32>
    %29 = arith.addf %28, %27 : vector<2x32xf32>
    %30 = arith.divf %28, %29 : vector<2x32xf32>
    %31 = arith.mulf %22, %5 : vector<2x32xf32>
    %32 = arith.mulf %16, %24 : vector<2x32xf32>
    %33 = arith.addf %31, %32 : vector<2x32xf32>
    %34 = math.tanh %33 : vector<2x32xf32>
    %35 = arith.mulf %30, %34 : vector<2x32xf32>
    %36 = arith.index_cast %c0_i32_6 : i32 to index
    %c0_12 = arith.constant 0 : index
    %c0_13 = arith.constant 0 : index
    %37 = vector.load %arg12[%36, %c0_12, %c0_13] : memref<8x2x32xf32, #tpu.memory_space<vmem>>, vector<1x2x32xf32>
    %38 = vector.shape_cast %37 : vector<1x2x32xf32> to vector<2x32xf32>
    %39 = vector.shape_cast %35 : vector<2x32xf32> to vector<1x2x32xf32>
    tpu.vector_store %arg12[%36, %c0_12, %c0_13], %39 {strides = array<i32>} : memref<8x2x32xf32, #tpu.memory_space<vmem>>, vector<1x2x32xf32>,
    %c1_i32 = arith.constant 1 : i32
    %40 = arith.index_cast %c1_i32 : i32 to index
    %c0_14 = arith.constant 0 : index
    %c0_15 = arith.constant 0 : index
    %41 = vector.load %arg1[%40, %c0_14, %c0_15] : memref<8x2x128xf32, #tpu.memory_space<vmem>>, vector<1x2x128xf32>
    %42 = vector.shape_cast %41 : vector<1x2x128xf32> to vector<2x128xf32>
    %cst_16 = arith.constant dense<0.000000e+00> : vector<2x128xf32>
    %43 = tpu.matmul %35, %3, %cst_16 {dimension_numbers = #tpu.dot_dimension_numbers<[1], [0], [0], [1], [0, 0, 1, 1], [], []>} : vector<2x32xf32>, vector<32x128xf32>, vector<2x128xf32> -> vector<2x128xf32>
    %44 = arith.addf %42, %43 : vector<2x128xf32>
    %45 = vector.extract_strided_slice %44 {offsets = [0, 0], sizes = [2, 32], strides = [1, 1]} : vector<2x128xf32> to vector<2x32xf32>
    %46 = arith.negf %45 : vector<2x32xf32>
    %47 = math.exp %46 : vector<2x32xf32>
    %cst_17 = arith.constant 1.000000e+00 : f32
    %48 = vector.broadcast %cst_17 : f32 to vector<2x32xf32>
    %49 = arith.addf %48, %47 : vector<2x32xf32>
    %50 = arith.divf %48, %49 : vector<2x32xf32>
    %51 = vector.extract_strided_slice %44 {offsets = [0, 32], sizes = [2, 32], strides = [1, 1]} : vector<2x128xf32> to vector<2x32xf32>
    %52 = arith.negf %51 : vector<2x32xf32>
    %53 = math.exp %52 : vector<2x32xf32>
    %cst_18 = arith.constant 1.000000e+00 : f32
    %54 = vector.broadcast %cst_18 : f32 to vector<2x32xf32>
    %55 = arith.addf %54, %53 : vector<2x32xf32>
    %56 = arith.divf %54, %55 : vector<2x32xf32>
    %57 = vector.extract_strided_slice %44 {offsets = [0, 64], sizes = [2, 32], strides = [1, 1]} : vector<2x128xf32> to vector<2x32xf32>
    %58 = math.tanh %57 : vector<2x32xf32>
    %59 = vector.extract_strided_slice %44 {offsets = [0, 96], sizes = [2, 32], strides = [1, 1]} : vector<2x128xf32> to vector<2x32xf32>
    %60 = arith.negf %59 : vector<2x32xf32>
    %61 = math.exp %60 : vector<2x32xf32>
    %cst_19 = arith.constant 1.000000e+00 : f32
    %62 = vector.broadcast %cst_19 : f32 to vector<2x32xf32>
    %63 = arith.addf %62, %61 : vector<2x32xf32>
    %64 = arith.divf %62, %63 : vector<2x32xf32>
    %65 = arith.mulf %56, %33 : vector<2x32xf32>
    %66 = arith.mulf %50, %58 : vector<2x32xf32>
    %67 = arith.addf %65, %66 : vector<2x32xf32>
    %68 = math.tanh %67 : vector<2x32xf32>
    %69 = arith.mulf %64, %68 : vector<2x32xf32>
    %70 = arith.index_cast %c1_i32 : i32 to index
    %c0_20 = arith.constant 0 : index
    %c0_21 = arith.constant 0 : index
    %71 = vector.load %arg12[%70, %c0_20, %c0_21] : memref<8x2x32xf32, #tpu.memory_space<vmem>>, vector<1x2x32xf32>
    %72 = vector.shape_cast %71 : vector<1x2x32xf32> to vector<2x32xf32>
    %73 = vector.shape_cast %69 : vector<2x32xf32> to vector<1x2x32xf32>
    tpu.vector_store %arg12[%70, %c0_20, %c0_21], %73 {strides = array<i32>} : memref<8x2x32xf32, #tpu.memory_space<vmem>>, vector<1x2x32xf32>,
    %c2_i32 = arith.constant 2 : i32
    %74 = arith.index_cast %c2_i32 : i32 to index
    %c0_22 = arith.constant 0 : index
    %c0_23 = arith.constant 0 : index
    %75 = vector.load %arg1[%74, %c0_22, %c0_23] : memref<8x2x128xf32, #tpu.memory_space<vmem>>, vector<1x2x128xf32>
    %76 = vector.shape_cast %75 : vector<1x2x128xf32> to vector<2x128xf32>
    %cst_24 = arith.constant dense<0.000000e+00> : vector<2x128xf32>
    %77 = tpu.matmul %69, %3, %cst_24 {dimension_numbers = #tpu.dot_dimension_numbers<[1], [0], [0], [1], [0, 0, 1, 1], [], []>} : vector<2x32xf32>, vector<32x128xf32>, vector<2x128xf32> -> vector<2x128xf32>
    %78 = arith.addf %76, %77 : vector<2x128xf32>
    %79 = vector.extract_strided_slice %78 {offsets = [0, 0], sizes = [2, 32], strides = [1, 1]} : vector<2x128xf32> to vector<2x32xf32>
    %80 = arith.negf %79 : vector<2x32xf32>
    %81 = math.exp %80 : vector<2x32xf32>
    %cst_25 = arith.constant 1.000000e+00 : f32
    %82 = vector.broadcast %cst_25 : f32 to vector<2x32xf32>
    %83 = arith.addf %82, %81 : vector<2x32xf32>
    %84 = arith.divf %82, %83 : vector<2x32xf32>
    %85 = vector.extract_strided_slice %78 {offsets = [0, 32], sizes = [2, 32], strides = [1, 1]} : vector<2x128xf32> to vector<2x32xf32>
    %86 = arith.negf %85 : vector<2x32xf32>
    %87 = math.exp %86 : vector<2x32xf32>
    %cst_26 = arith.constant 1.000000e+00 : f32
    %88 = vector.broadcast %cst_26 : f32 to vector<2x32xf32>
    %89 = arith.addf %88, %87 : vector<2x32xf32>
    %90 = arith.divf %88, %89 : vector<2x32xf32>
    %91 = vector.extract_strided_slice %78 {offsets = [0, 64], sizes = [2, 32], strides = [1, 1]} : vector<2x128xf32> to vector<2x32xf32>
    %92 = math.tanh %91 : vector<2x32xf32>
    %93 = vector.extract_strided_slice %78 {offsets = [0, 96], sizes = [2, 32], strides = [1, 1]} : vector<2x128xf32> to vector<2x32xf32>
    %94 = arith.negf %93 : vector<2x32xf32>
    %95 = math.exp %94 : vector<2x32xf32>
    %cst_27 = arith.constant 1.000000e+00 : f32
    %96 = vector.broadcast %cst_27 : f32 to vector<2x32xf32>
    %97 = arith.addf %96, %95 : vector<2x32xf32>
    %98 = arith.divf %96, %97 : vector<2x32xf32>
    %99 = arith.mulf %90, %67 : vector<2x32xf32>
    %100 = arith.mulf %84, %92 : vector<2x32xf32>
    %101 = arith.addf %99, %100 : vector<2x32xf32>
    %102 = math.tanh %101 : vector<2x32xf32>
    %103 = arith.mulf %98, %102 : vector<2x32xf32>
    %104 = arith.index_cast %c2_i32 : i32 to index
    %c0_28 = arith.constant 0 : index
    %c0_29 = arith.constant 0 : index
    %105 = vector.load %arg12[%104, %c0_28, %c0_29] : memref<8x2x32xf32, #tpu.memory_space<vmem>>, vector<1x2x32xf32>
    %106 = vector.shape_cast %105 : vector<1x2x32xf32> to vector<2x32xf32>
    %107 = vector.shape_cast %103 : vector<2x32xf32> to vector<1x2x32xf32>
    tpu.vector_store %arg12[%104, %c0_28, %c0_29], %107 {strides = array<i32>} : memref<8x2x32xf32, #tpu.memory_space<vmem>>, vector<1x2x32xf32>,
    %c3_i32 = arith.constant 3 : i32
    %108 = arith.index_cast %c3_i32 : i32 to index
    %c0_30 = arith.constant 0 : index
    %c0_31 = arith.constant 0 : index
    %109 = vector.load %arg1[%108, %c0_30, %c0_31] : memref<8x2x128xf32, #tpu.memory_space<vmem>>, vector<1x2x128xf32>
    %110 = vector.shape_cast %109 : vector<1x2x128xf32> to vector<2x128xf32>
    %cst_32 = arith.constant dense<0.000000e+00> : vector<2x128xf32>
    %111 = tpu.matmul %103, %3, %cst_32 {dimension_numbers = #tpu.dot_dimension_numbers<[1], [0], [0], [1], [0, 0, 1, 1], [], []>} : vector<2x32xf32>, vector<32x128xf32>, vector<2x128xf32> -> vector<2x128xf32>
    %112 = arith.addf %110, %111 : vector<2x128xf32>
    %113 = vector.extract_strided_slice %112 {offsets = [0, 0], sizes = [2, 32], strides = [1, 1]} : vector<2x128xf32> to vector<2x32xf32>
    %114 = arith.negf %113 : vector<2x32xf32>
    %115 = math.exp %114 : vector<2x32xf32>
    %cst_33 = arith.constant 1.000000e+00 : f32
    %116 = vector.broadcast %cst_33 : f32 to vector<2x32xf32>
    %117 = arith.addf %116, %115 : vector<2x32xf32>
    %118 = arith.divf %116, %117 : vector<2x32xf32>
    %119 = vector.extract_strided_slice %112 {offsets = [0, 32], sizes = [2, 32], strides = [1, 1]} : vector<2x128xf32> to vector<2x32xf32>
    %120 = arith.negf %119 : vector<2x32xf32>
    %121 = math.exp %120 : vector<2x32xf32>
    %cst_34 = arith.constant 1.000000e+00 : f32
    %122 = vector.broadcast %cst_34 : f32 to vector<2x32xf32>
    %123 = arith.addf %122, %121 : vector<2x32xf32>
    %124 = arith.divf %122, %123 : vector<2x32xf32>
    %125 = vector.extract_strided_slice %112 {offsets = [0, 64], sizes = [2, 32], strides = [1, 1]} : vector<2x128xf32> to vector<2x32xf32>
    %126 = math.tanh %125 : vector<2x32xf32>
    %127 = vector.extract_strided_slice %112 {offsets = [0, 96], sizes = [2, 32], strides = [1, 1]} : vector<2x128xf32> to vector<2x32xf32>
    %128 = arith.negf %127 : vector<2x32xf32>
    %129 = math.exp %128 : vector<2x32xf32>
    %cst_35 = arith.constant 1.000000e+00 : f32
    %130 = vector.broadcast %cst_35 : f32 to vector<2x32xf32>
    %131 = arith.addf %130, %129 : vector<2x32xf32>
    %132 = arith.divf %130, %131 : vector<2x32xf32>
    %133 = arith.mulf %124, %101 : vector<2x32xf32>
    %134 = arith.mulf %118, %126 : vector<2x32xf32>
    %135 = arith.addf %133, %134 : vector<2x32xf32>
    %136 = math.tanh %135 : vector<2x32xf32>
    %137 = arith.mulf %132, %136 : vector<2x32xf32>
    %138 = arith.index_cast %c3_i32 : i32 to index
    %c0_36 = arith.constant 0 : index
    %c0_37 = arith.constant 0 : index
    %139 = vector.load %arg12[%138, %c0_36, %c0_37] : memref<8x2x32xf32, #tpu.memory_space<vmem>>, vector<1x2x32xf32>
    %140 = vector.shape_cast %139 : vector<1x2x32xf32> to vector<2x32xf32>
    %141 = vector.shape_cast %137 : vector<2x32xf32> to vector<1x2x32xf32>
    tpu.vector_store %arg12[%138, %c0_36, %c0_37], %141 {strides = array<i32>} : memref<8x2x32xf32, #tpu.memory_space<vmem>>, vector<1x2x32xf32>,
    %c4_i32 = arith.constant 4 : i32
    %142 = arith.index_cast %c4_i32 : i32 to index
    %c0_38 = arith.constant 0 : index
    %c0_39 = arith.constant 0 : index
    %143 = vector.load %arg1[%142, %c0_38, %c0_39] : memref<8x2x128xf32, #tpu.memory_space<vmem>>, vector<1x2x128xf32>
    %144 = vector.shape_cast %143 : vector<1x2x128xf32> to vector<2x128xf32>
    %cst_40 = arith.constant dense<0.000000e+00> : vector<2x128xf32>
    %145 = tpu.matmul %137, %3, %cst_40 {dimension_numbers = #tpu.dot_dimension_numbers<[1], [0], [0], [1], [0, 0, 1, 1], [], []>} : vector<2x32xf32>, vector<32x128xf32>, vector<2x128xf32> -> vector<2x128xf32>
    %146 = arith.addf %144, %145 : vector<2x128xf32>
    %147 = vector.extract_strided_slice %146 {offsets = [0, 0], sizes = [2, 32], strides = [1, 1]} : vector<2x128xf32> to vector<2x32xf32>
    %148 = arith.negf %147 : vector<2x32xf32>
    %149 = math.exp %148 : vector<2x32xf32>
    %cst_41 = arith.constant 1.000000e+00 : f32
    %150 = vector.broadcast %cst_41 : f32 to vector<2x32xf32>
    %151 = arith.addf %150, %149 : vector<2x32xf32>
    %152 = arith.divf %150, %151 : vector<2x32xf32>
    %153 = vector.extract_strided_slice %146 {offsets = [0, 32], sizes = [2, 32], strides = [1, 1]} : vector<2x128xf32> to vector<2x32xf32>
    %154 = arith.negf %153 : vector<2x32xf32>
    %155 = math.exp %154 : vector<2x32xf32>
    %cst_42 = arith.constant 1.000000e+00 : f32
    %156 = vector.broadcast %cst_42 : f32 to vector<2x32xf32>
    %157 = arith.addf %156, %155 : vector<2x32xf32>
    %158 = arith.divf %156, %157 : vector<2x32xf32>
    %159 = vector.extract_strided_slice %146 {offsets = [0, 64], sizes = [2, 32], strides = [1, 1]} : vector<2x128xf32> to vector<2x32xf32>
    %160 = math.tanh %159 : vector<2x32xf32>
    %161 = vector.extract_strided_slice %146 {offsets = [0, 96], sizes = [2, 32], strides = [1, 1]} : vector<2x128xf32> to vector<2x32xf32>
    %162 = arith.negf %161 : vector<2x32xf32>
    %163 = math.exp %162 : vector<2x32xf32>
    %cst_43 = arith.constant 1.000000e+00 : f32
    %164 = vector.broadcast %cst_43 : f32 to vector<2x32xf32>
    %165 = arith.addf %164, %163 : vector<2x32xf32>
    %166 = arith.divf %164, %165 : vector<2x32xf32>
    %167 = arith.mulf %158, %135 : vector<2x32xf32>
    %168 = arith.mulf %152, %160 : vector<2x32xf32>
    %169 = arith.addf %167, %168 : vector<2x32xf32>
    %170 = math.tanh %169 : vector<2x32xf32>
    %171 = arith.mulf %166, %170 : vector<2x32xf32>
    %172 = arith.index_cast %c4_i32 : i32 to index
    %c0_44 = arith.constant 0 : index
    %c0_45 = arith.constant 0 : index
    %173 = vector.load %arg12[%172, %c0_44, %c0_45] : memref<8x2x32xf32, #tpu.memory_space<vmem>>, vector<1x2x32xf32>
    %174 = vector.shape_cast %173 : vector<1x2x32xf32> to vector<2x32xf32>
    %175 = vector.shape_cast %171 : vector<2x32xf32> to vector<1x2x32xf32>
    tpu.vector_store %arg12[%172, %c0_44, %c0_45], %175 {strides = array<i32>} : memref<8x2x32xf32, #tpu.memory_space<vmem>>, vector<1x2x32xf32>,
    %c5_i32 = arith.constant 5 : i32
    %176 = arith.index_cast %c5_i32 : i32 to index
    %c0_46 = arith.constant 0 : index
    %c0_47 = arith.constant 0 : index
    %177 = vector.load %arg1[%176, %c0_46, %c0_47] : memref<8x2x128xf32, #tpu.memory_space<vmem>>, vector<1x2x128xf32>
    %178 = vector.shape_cast %177 : vector<1x2x128xf32> to vector<2x128xf32>
    %cst_48 = arith.constant dense<0.000000e+00> : vector<2x128xf32>
    %179 = tpu.matmul %171, %3, %cst_48 {dimension_numbers = #tpu.dot_dimension_numbers<[1], [0], [0], [1], [0, 0, 1, 1], [], []>} : vector<2x32xf32>, vector<32x128xf32>, vector<2x128xf32> -> vector<2x128xf32>
    %180 = arith.addf %178, %179 : vector<2x128xf32>
    %181 = vector.extract_strided_slice %180 {offsets = [0, 0], sizes = [2, 32], strides = [1, 1]} : vector<2x128xf32> to vector<2x32xf32>
    %182 = arith.negf %181 : vector<2x32xf32>
    %183 = math.exp %182 : vector<2x32xf32>
    %cst_49 = arith.constant 1.000000e+00 : f32
    %184 = vector.broadcast %cst_49 : f32 to vector<2x32xf32>
    %185 = arith.addf %184, %183 : vector<2x32xf32>
    %186 = arith.divf %184, %185 : vector<2x32xf32>
    %187 = vector.extract_strided_slice %180 {offsets = [0, 32], sizes = [2, 32], strides = [1, 1]} : vector<2x128xf32> to vector<2x32xf32>
    %188 = arith.negf %187 : vector<2x32xf32>
    %189 = math.exp %188 : vector<2x32xf32>
    %cst_50 = arith.constant 1.000000e+00 : f32
    %190 = vector.broadcast %cst_50 : f32 to vector<2x32xf32>
    %191 = arith.addf %190, %189 : vector<2x32xf32>
    %192 = arith.divf %190, %191 : vector<2x32xf32>
    %193 = vector.extract_strided_slice %180 {offsets = [0, 64], sizes = [2, 32], strides = [1, 1]} : vector<2x128xf32> to vector<2x32xf32>
    %194 = math.tanh %193 : vector<2x32xf32>
    %195 = vector.extract_strided_slice %180 {offsets = [0, 96], sizes = [2, 32], strides = [1, 1]} : vector<2x128xf32> to vector<2x32xf32>
    %196 = arith.negf %195 : vector<2x32xf32>
    %197 = math.exp %196 : vector<2x32xf32>
    %cst_51 = arith.constant 1.000000e+00 : f32
    %198 = vector.broadcast %cst_51 : f32 to vector<2x32xf32>
    %199 = arith.addf %198, %197 : vector<2x32xf32>
    %200 = arith.divf %198, %199 : vector<2x32xf32>
    %201 = arith.mulf %192, %169 : vector<2x32xf32>
    %202 = arith.mulf %186, %194 : vector<2x32xf32>
    %203 = arith.addf %201, %202 : vector<2x32xf32>
    %204 = math.tanh %203 : vector<2x32xf32>
    %205 = arith.mulf %200, %204 : vector<2x32xf32>
    %206 = arith.index_cast %c5_i32 : i32 to index
    %c0_52 = arith.constant 0 : index
    %c0_53 = arith.constant 0 : index
    %207 = vector.load %arg12[%206, %c0_52, %c0_53] : memref<8x2x32xf32, #tpu.memory_space<vmem>>, vector<1x2x32xf32>
    %208 = vector.shape_cast %207 : vector<1x2x32xf32> to vector<2x32xf32>
    %209 = vector.shape_cast %205 : vector<2x32xf32> to vector<1x2x32xf32>
    tpu.vector_store %arg12[%206, %c0_52, %c0_53], %209 {strides = array<i32>} : memref<8x2x32xf32, #tpu.memory_space<vmem>>, vector<1x2x32xf32>,
    %c6_i32 = arith.constant 6 : i32
    %210 = arith.index_cast %c6_i32 : i32 to index
    %c0_54 = arith.constant 0 : index
    %c0_55 = arith.constant 0 : index
    %211 = vector.load %arg1[%210, %c0_54, %c0_55] : memref<8x2x128xf32, #tpu.memory_space<vmem>>, vector<1x2x128xf32>
    %212 = vector.shape_cast %211 : vector<1x2x128xf32> to vector<2x128xf32>
    %cst_56 = arith.constant dense<0.000000e+00> : vector<2x128xf32>
    %213 = tpu.matmul %205, %3, %cst_56 {dimension_numbers = #tpu.dot_dimension_numbers<[1], [0], [0], [1], [0, 0, 1, 1], [], []>} : vector<2x32xf32>, vector<32x128xf32>, vector<2x128xf32> -> vector<2x128xf32>
    %214 = arith.addf %212, %213 : vector<2x128xf32>
    %215 = vector.extract_strided_slice %214 {offsets = [0, 0], sizes = [2, 32], strides = [1, 1]} : vector<2x128xf32> to vector<2x32xf32>
    %216 = arith.negf %215 : vector<2x32xf32>
    %217 = math.exp %216 : vector<2x32xf32>
    %cst_57 = arith.constant 1.000000e+00 : f32
    %218 = vector.broadcast %cst_57 : f32 to vector<2x32xf32>
    %219 = arith.addf %218, %217 : vector<2x32xf32>
    %220 = arith.divf %218, %219 : vector<2x32xf32>
    %221 = vector.extract_strided_slice %214 {offsets = [0, 32], sizes = [2, 32], strides = [1, 1]} : vector<2x128xf32> to vector<2x32xf32>
    %222 = arith.negf %221 : vector<2x32xf32>
    %223 = math.exp %222 : vector<2x32xf32>
    %cst_58 = arith.constant 1.000000e+00 : f32
    %224 = vector.broadcast %cst_58 : f32 to vector<2x32xf32>
    %225 = arith.addf %224, %223 : vector<2x32xf32>
    %226 = arith.divf %224, %225 : vector<2x32xf32>
    %227 = vector.extract_strided_slice %214 {offsets = [0, 64], sizes = [2, 32], strides = [1, 1]} : vector<2x128xf32> to vector<2x32xf32>
    %228 = math.tanh %227 : vector<2x32xf32>
    %229 = vector.extract_strided_slice %214 {offsets = [0, 96], sizes = [2, 32], strides = [1, 1]} : vector<2x128xf32> to vector<2x32xf32>
    %230 = arith.negf %229 : vector<2x32xf32>
    %231 = math.exp %230 : vector<2x32xf32>
    %cst_59 = arith.constant 1.000000e+00 : f32
    %232 = vector.broadcast %cst_59 : f32 to vector<2x32xf32>
    %233 = arith.addf %232, %231 : vector<2x32xf32>
    %234 = arith.divf %232, %233 : vector<2x32xf32>
    %235 = arith.mulf %226, %203 : vector<2x32xf32>
    %236 = arith.mulf %220, %228 : vector<2x32xf32>
    %237 = arith.addf %235, %236 : vector<2x32xf32>
    %238 = math.tanh %237 : vector<2x32xf32>
    %239 = arith.mulf %234, %238 : vector<2x32xf32>
    %240 = arith.index_cast %c6_i32 : i32 to index
    %c0_60 = arith.constant 0 : index
    %c0_61 = arith.constant 0 : index
    %241 = vector.load %arg12[%240, %c0_60, %c0_61] : memref<8x2x32xf32, #tpu.memory_space<vmem>>, vector<1x2x32xf32>
    %242 = vector.shape_cast %241 : vector<1x2x32xf32> to vector<2x32xf32>
    %243 = vector.shape_cast %239 : vector<2x32xf32> to vector<1x2x32xf32>
    tpu.vector_store %arg12[%240, %c0_60, %c0_61], %243 {strides = array<i32>} : memref<8x2x32xf32, #tpu.memory_space<vmem>>, vector<1x2x32xf32>,
    %c7_i32 = arith.constant 7 : i32
    %244 = arith.index_cast %c7_i32 : i32 to index
    %c0_62 = arith.constant 0 : index
    %c0_63 = arith.constant 0 : index
    %245 = vector.load %arg1[%244, %c0_62, %c0_63] : memref<8x2x128xf32, #tpu.memory_space<vmem>>, vector<1x2x128xf32>
    %246 = vector.shape_cast %245 : vector<1x2x128xf32> to vector<2x128xf32>
    %cst_64 = arith.constant dense<0.000000e+00> : vector<2x128xf32>
    %247 = tpu.matmul %239, %3, %cst_64 {dimension_numbers = #tpu.dot_dimension_numbers<[1], [0], [0], [1], [0, 0, 1, 1], [], []>} : vector<2x32xf32>, vector<32x128xf32>, vector<2x128xf32> -> vector<2x128xf32>
    %248 = arith.addf %246, %247 : vector<2x128xf32>
    %249 = vector.extract_strided_slice %248 {offsets = [0, 0], sizes = [2, 32], strides = [1, 1]} : vector<2x128xf32> to vector<2x32xf32>
    %250 = arith.negf %249 : vector<2x32xf32>
    %251 = math.exp %250 : vector<2x32xf32>
    %cst_65 = arith.constant 1.000000e+00 : f32
    %252 = vector.broadcast %cst_65 : f32 to vector<2x32xf32>
    %253 = arith.addf %252, %251 : vector<2x32xf32>
    %254 = arith.divf %252, %253 : vector<2x32xf32>
    %255 = vector.extract_strided_slice %248 {offsets = [0, 32], sizes = [2, 32], strides = [1, 1]} : vector<2x128xf32> to vector<2x32xf32>
    %256 = arith.negf %255 : vector<2x32xf32>
    %257 = math.exp %256 : vector<2x32xf32>
    %cst_66 = arith.constant 1.000000e+00 : f32
    %258 = vector.broadcast %cst_66 : f32 to vector<2x32xf32>
    %259 = arith.addf %258, %257 : vector<2x32xf32>
    %260 = arith.divf %258, %259 : vector<2x32xf32>
    %261 = vector.extract_strided_slice %248 {offsets = [0, 64], sizes = [2, 32], strides = [1, 1]} : vector<2x128xf32> to vector<2x32xf32>
    %262 = math.tanh %261 : vector<2x32xf32>
    %263 = vector.extract_strided_slice %248 {offsets = [0, 96], sizes = [2, 32], strides = [1, 1]} : vector<2x128xf32> to vector<2x32xf32>
    %264 = arith.negf %263 : vector<2x32xf32>
    %265 = math.exp %264 : vector<2x32xf32>
    %cst_67 = arith.constant 1.000000e+00 : f32
    %266 = vector.broadcast %cst_67 : f32 to vector<2x32xf32>
    %267 = arith.addf %266, %265 : vector<2x32xf32>
    %268 = arith.divf %266, %267 : vector<2x32xf32>
    %269 = arith.mulf %260, %237 : vector<2x32xf32>
    %270 = arith.mulf %254, %262 : vector<2x32xf32>
    %271 = arith.addf %269, %270 : vector<2x32xf32>
    %272 = math.tanh %271 : vector<2x32xf32>
    %273 = arith.mulf %268, %272 : vector<2x32xf32>
    %274 = arith.index_cast %c7_i32 : i32 to index
    %c0_68 = arith.constant 0 : index
    %c0_69 = arith.constant 0 : index
    %275 = vector.load %arg12[%274, %c0_68, %c0_69] : memref<8x2x32xf32, #tpu.memory_space<vmem>>, vector<1x2x32xf32>
    %276 = vector.shape_cast %275 : vector<1x2x32xf32> to vector<2x32xf32>
    %277 = vector.shape_cast %273 : vector<2x32xf32> to vector<1x2x32xf32>
    tpu.vector_store %arg12[%274, %c0_68, %c0_69], %277 {strides = array<i32>} : memref<8x2x32xf32, #tpu.memory_space<vmem>>, vector<1x2x32xf32>,
    %c8_i32 = arith.constant 8 : i32
    %c0_70 = arith.constant 0 : index
    %c0_71 = arith.constant 0 : index
    %278 = vector.load %arg10[%c0_70, %c0_71] : memref<2x32xf32, #tpu.memory_space<vmem>>, vector<2x32xf32>
    tpu.vector_store %arg10[%c0_70, %c0_71], %273 {strides = array<i32>} : memref<2x32xf32, #tpu.memory_space<vmem>>, vector<2x32xf32>,
    %c0_72 = arith.constant 0 : index
    %c0_73 = arith.constant 0 : index
    %279 = vector.load %arg11[%c0_72, %c0_73] : memref<2x32xf32, #tpu.memory_space<vmem>>, vector<2x32xf32>
    tpu.vector_store %arg11[%c0_72, %c0_73], %271 {strides = array<i32>} : memref<2x32xf32, #tpu.memory_space<vmem>>, vector<2x32xf32>,
    %c0_74 = arith.constant 0 : index
    %c0_75 = arith.constant 0 : index
    %c0_76 = arith.constant 0 : index
    %280 = vector.load %arg12[%c0_74, %c0_75, %c0_76] : memref<8x2x32xf32, #tpu.memory_space<vmem>>, vector<8x2x32xf32>
    %281 = vector.shape_cast %280 : vector<8x2x32xf32> to vector<16x32xf32>
    %c0_77 = arith.constant 0 : index
    %c0_78 = arith.constant 0 : index
    %282 = vector.load %arg3[%c0_77, %c0_78] : memref<32x16xf32, #tpu.memory_space<vmem>>, vector<32x16xf32>
    %cst_79 = arith.constant dense<0.000000e+00> : vector<16x16xf32>
    %283 = tpu.matmul %281, %282, %cst_79 {dimension_numbers = #tpu.dot_dimension_numbers<[1], [0], [0], [1], [0, 0, 1, 1], [], []>} : vector<16x32xf32>, vector<32x16xf32>, vector<16x16xf32> -> vector<16x16xf32>
    %c0_80 = arith.constant 0 : index
    %c0_81 = arith.constant 0 : index
    %284 = vector.load %arg4[%c0_80, %c0_81] : memref<1x16xf32, #tpu.memory_space<vmem>>, vector<1x16xf32>
    %285 = vector.broadcast %284 : vector<1x16xf32> to vector<16x16xf32>
    %286 = arith.addf %283, %285 : vector<16x16xf32>
    %287 = vector.shape_cast %286 : vector<16x16xf32> to vector<8x2x16xf32>
    %c0_82 = arith.constant 0 : index
    %c0_83 = arith.constant 0 : index
    %c0_84 = arith.constant 0 : index
    %288 = vector.load %arg7[%c0_82, %c0_83, %c0_84] : memref<8x2x16xf32, #tpu.memory_space<vmem>>, vector<8x2x16xf32>
    tpu.vector_store %arg7[%c0_82, %c0_83, %c0_84], %287 {strides = array<i32>} : memref<8x2x16xf32, #tpu.memory_space<vmem>>, vector<8x2x16xf32>,
    %c0_i32_85 = arith.constant 0 : i32
    %289 = arith.cmpi eq, %arg0, %c0_i32_85 : i32
    %290 = arith.extui %289 : i1 to i32
    %c0_i32_86 = arith.constant 0 : i32
    %291 = arith.cmpi ne, %290, %c0_i32_86 : i32
    scf.if %291 {
      %c0_87 = arith.constant 0 : index
      %c0_88 = arith.constant 0 : index
      %292 = vector.load %arg8[%c0_87, %c0_88] : memref<2x32xf32, #tpu.memory_space<vmem>>, vector<2x32xf32>
      tpu.vector_store %arg8[%c0_87, %c0_88], %273 {strides = array<i32>} : memref<2x32xf32, #tpu.memory_space<vmem>>, vector<2x32xf32>,
      %c0_89 = arith.constant 0 : index
      %c0_90 = arith.constant 0 : index
      %293 = vector.load %arg9[%c0_89, %c0_90] : memref<2x32xf32, #tpu.memory_space<vmem>>, vector<2x32xf32>
      tpu.vector_store %arg9[%c0_89, %c0_90], %271 {strides = array<i32>} : memref<2x32xf32, #tpu.memory_space<vmem>>, vector<2x32xf32>,
    } else {
    }
    return
  }
  func.func @transform_0(%arg0: i32) -> (i32, i32, i32) {
    %c0_i32 = arith.constant 0 : i32
    %c0_i32_0 = arith.constant 0 : i32
    %c0_i32_1 = arith.constant 0 : i32
    return %arg0, %c0_i32, %c0_i32_0 : i32, i32, i32
  }
  func.func @transform_1(%arg0: i32) -> (i32, i32) {
    %c0_i32 = arith.constant 0 : i32
    %c0_i32_0 = arith.constant 0 : i32
    %c0_i32_1 = arith.constant 0 : i32
    return %c0_i32, %c0_i32_0 : i32, i32
  }
  func.func @transform_2(%arg0: i32) -> (i32, i32) {
    %c0_i32 = arith.constant 0 : i32
    %c0_i32_0 = arith.constant 0 : i32
    %c0_i32_1 = arith.constant 0 : i32
    return %c0_i32, %c0_i32_0 : i32, i32
  }
  func.func @transform_3(%arg0: i32) -> (i32, i32) {
    %c0_i32 = arith.constant 0 : i32
    %c0_i32_0 = arith.constant 0 : i32
    %c0_i32_1 = arith.constant 0 : i32
    return %c0_i32, %c0_i32_0 : i32, i32
  }
  func.func @transform_4(%arg0: i32) -> (i32, i32) {
    %c0_i32 = arith.constant 0 : i32
    %c0_i32_0 = arith.constant 0 : i32
    %c0_i32_1 = arith.constant 0 : i32
    return %c0_i32, %c0_i32_0 : i32, i32
  }
  func.func @transform_5(%arg0: i32) -> (i32, i32) {
    %c0_i32 = arith.constant 0 : i32
    %c0_i32_0 = arith.constant 0 : i32
    %c0_i32_1 = arith.constant 0 : i32
    return %c0_i32, %c0_i32_0 : i32, i32
  }
  func.func @transform_6(%arg0: i32) -> (i32, i32, i32) {
    %c0_i32 = arith.constant 0 : i32
    %c0_i32_0 = arith.constant 0 : i32
    %c0_i32_1 = arith.constant 0 : i32
    return %arg0, %c0_i32, %c0_i32_0 : i32, i32, i32
  }
  func.func @transform_7(%arg0: i32) -> (i32, i32) {
    %c0_i32 = arith.constant 0 : i32
    %c0_i32_0 = arith.constant 0 : i32
    %c0_i32_1 = arith.constant 0 : i32
    return %c0_i32, %c0_i32_0 : i32, i32
  }
  func.func @transform_8(%arg0: i32) -> (i32, i32) {
    %c0_i32 = arith.constant 0 : i32
    %c0_i32_0 = arith.constant 0 : i32
    %c0_i32_1 = arith.constant 0 : i32
    return %c0_i32, %c0_i32_0 : i32, i32
  }
}

</mosaic_0001>

<llo_original>
// kernel: decoder_forward.1
$region0: #{decoder_forward.1}
  #allocation0 [shape = 'u32[]', space=smem, size = 0x4, offset = 0x4, fixed_abs, tag = 'smem constant byte address 0x4 - core index']
  #allocation1 [shape = 'u32[144,128]{1,0:T(1,128)}', space=vmem, size = 0x12000, scoped, tag = 'internal scratch']
  #allocation2 [shape = 'f32[2,32]{1,0:T(2,128)}', space=vmem, size = 0x400, scoped, tag = 'scratch operand']
  #allocation3 [shape = 'f32[2,32]{1,0:T(2,128)}', space=vmem, size = 0x400, scoped, tag = 'scratch operand']
  #allocation4 [shape = 'f32[8,2,32]{2,1,0:T(2,128)}', space=vmem, size = 0x2000, scoped, tag = 'scratch operand']
  %s0 = inlined_call_operand.vmem [shape: f32[8,2,128], index: 0, kind: input, shape index: {}]
  %s1 = inlined_call_operand.vmem [shape: f32[32,128], index: 1, kind: input, shape index: {}]
  %s2 = inlined_call_operand.vmem [shape: f32[32,16], index: 2, kind: input, shape index: {}]
  %s3 = inlined_call_operand.vmem [shape: f32[1,16], index: 3, kind: input, shape index: {}]
  %s4 = inlined_call_operand.vmem [shape: f32[2,32], index: 4, kind: input, shape index: {}]
  %s5 = inlined_call_operand.vmem [shape: f32[2,32], index: 5, kind: input, shape index: {}]
  %s6 = inlined_call_operand.vmem [shape: f32[8,2,16], index: 6, kind: output, shape index: {0}]
  %s7 = inlined_call_operand.hbm [shape: f32[2,32], index: 7, kind: output, shape index: {1}]
  %s8 = inlined_call_operand.hbm [shape: f32[2,32], index: 8, kind: output, shape index: {2}]
  %9 = xla_tuple %s6, %s7, %s8
  %s10 = sld [smem:[#allocation0]]
  $region58: #{decoder_forward.1} parent=0
    _
  %s12 = ssub.s32 1, %s10
  %s13 = scalar_select 0, %s12, %s10
  $region1: #{decoder_forward.1} parent=0
    #allocation5 [shape = 'u8[1024]{0}', space=vmem, size = 0x400, scoped, tag = 'output window, operand 1, single buffered']
    #allocation6 [shape = 's32[1]{0}', space=sflag, size = 0x4, scoped, tag = 'scoped memory for decoder_forward.1']
    #allocation7 [shape = 'u8[1024]{0}', space=vmem, size = 0x400, scoped, tag = 'output window, operand 2, single buffered']
    #allocation8 [shape = 's32[1]{0}', space=sflag, size = 0x4, scoped, tag = 'scoped memory for decoder_forward.1']
    %14 = vsyncpa [#allocation6], 0
    %15 = vsyncpa [#allocation8], 0
    // Predicated region
    $region2: #{decoder_forward.1} parent=1 // pred_check
      _
    $region3: #{decoder_forward.1} parent=1 // pred_check_branch
      %17 = sbr.rel (0) target = $region5
    $region4: #{decoder_forward.1} parent=1 // pred_region
      _
    $region5: #{decoder_forward.1} parent=1 // pred_fallthru
      _
    // Predicated region
    $region6: #{decoder_forward.1} parent=1 // pred_check
      _
    $region7: #{decoder_forward.1} parent=1 // pred_check_branch
      %19 = sbr.rel (0) target = $region9
    $region8: #{decoder_forward.1} parent=1 // pred_region
      _
    $region9: #{decoder_forward.1} parent=1 // pred_fallthru
      _
    // Predicated region
    $region10: #{decoder_forward.1} parent=1 // pred_check
      _
    $region11: #{decoder_forward.1} parent=1 // pred_check_branch
      %21 = sbr.rel (0) target = $region13
    $region12: #{decoder_forward.1} parent=1 // pred_region
      _
    $region13: #{decoder_forward.1} parent=1 // pred_fallthru
      _
    // Predicated region
    $region14: #{decoder_forward.1} parent=1 // pred_check
      _
    $region15: #{decoder_forward.1} parent=1 // pred_check_branch
      %23 = sbr.rel (0) target = $region17
    $region16: #{decoder_forward.1} parent=1 // pred_region
      _
    $region17: #{decoder_forward.1} parent=1 // pred_fallthru
      _
    // Predicated region
    $region18: #{decoder_forward.1} parent=1 // pred_check
      _
    $region19: #{decoder_forward.1} parent=1 // pred_check_branch
      %25 = sbr.rel (0) target = $region21
    $region20: #{decoder_forward.1} parent=1 // pred_region
      _
    $region21: #{decoder_forward.1} parent=1 // pred_fallthru
      _
    // Predicated region
    $region22: #{decoder_forward.1} parent=1 // pred_check
      _
    $region23: #{decoder_forward.1} parent=1 // pred_check_branch
      %27 = sbr.rel (0) target = $region25
    $region24: #{decoder_forward.1} parent=1 // pred_region
      _
    $region25: #{decoder_forward.1} parent=1 // pred_fallthru
      _
    %p28 = scmp.eq.s32.totalorder 0, 0
    // Predicated region
    $region26: #{decoder_forward.1} parent=1 // pred_check
      %p29 = pneg %p28
    $region27: #{decoder_forward.1} parent=1 // pred_check_branch
      %31 = sbr.rel (%p29) target = $region29
    $region28: #{decoder_forward.1} parent=1 // pred_region
      %v32 = vld [vmem:[%s4] sm:$0x3]
      %vm33 = vcmask 254976
      %34 = vst.msk [vmem:[#allocation2] sm:$0x3] %vm33, %v32
      %v35 = vld [vmem:[%s5] sm:$0x3]
      %36 = vst.msk [vmem:[#allocation3] sm:$0x3] %vm33, %v35
    $region29: #{decoder_forward.1} parent=1 // pred_fallthru
      _
    %v37 = vld [vmem:[%s1] sm:$0xff]
    %v38 = vld [vmem:[%s1 + $0x8] sm:$0xff]
    %v39 = vld [vmem:[%s1 + $0x10] sm:$0xff]
    %v40 = vld [vmem:[%s1 + $0x18] sm:$0xff]
    %v41 = vld [vmem:[#allocation2] sm:$0x3]
    %v42 = vld [vmem:[#allocation3] sm:$0x3]
    %v43 = vld [vmem:[%s0] sm:$0x3]
    %vm44 = vcmask 261120
    %v46 = vsel %vm44, %v41, 0
    %48 = vmatprep.subr.mxu0 0.0
    %49 = vmatpush1.msra.mxu0 %v37
    %50 = vmatprep.subr.mxu0 0.0
    %51 = vmatpush1.msra.mxu0 %v38
    %52 = vmatprep.subr.mxu0 0.0
    %53 = vmatpush1.msra.mxu0 %v39
    %54 = vmatprep.subr.mxu0 0.0
    %55 = vmatpush1.msra.mxu0 %v40
    %56 = vmatprep.subr.mxu0 0.0
    %57 = vmatpush1.msra.mxu0 0.0
    %58 = vmatprep.subr.mxu0 0.0
    %59 = vmatpush1.msra.mxu0 0.0
    %60 = vmatprep.subr.mxu0 0.0
    %61 = vmatpush1.msra.mxu0 0.0
    %62 = vmatprep.subr.mxu0 0.0
    %63 = vmatpush1.msra.mxu0 0.0
    %64 = vmatprep.subr.mxu0 0.0
    %65 = vmatpush1.msra.mxu0 0.0
    %66 = vmatprep.subr.mxu0 0.0
    %67 = vmatpush1.msra.mxu0 0.0
    %68 = vmatprep.subr.mxu0 0.0
    %69 = vmatpush1.msra.mxu0 0.0
    %70 = vmatprep.subr.mxu0 0.0
    %71 = vmatpush1.msra.mxu0 0.0
    %72 = vmatprep.subr.mxu0 0.0
    %73 = vmatpush1.msra.mxu0 0.0
    %74 = vmatprep.subr.mxu0 0.0
    %75 = vmatpush1.msra.mxu0 0.0
    %76 = vmatprep.subr.mxu0 0.0
    %77 = vmatpush1.msra.mxu0 0.0
    %78 = vmatprep.subr.mxu0 0.0
    %79 = vmatpush1.msra.mxu0 0.0
    %80 = vmatprep.subr.mxu0 0.0
    %81 = vmatpush1.msra.mxu0 0.0
    %82 = vmatprep.subr.mxu0 0.0
    %83 = vmatpush1.msra.mxu0 0.0
    %84 = vmatprep.subr.mxu0 0.0
    %85 = vmatpush1.msra.mxu0 0.0
    %86 = vmatprep.subr.mxu0 0.0
    %87 = vmatpush1.msra.mxu0 0.0
    %88 = vmatprep.subr.mxu0 0.0
    %89 = vmatpush1.msra.mxu0 0.0
    %90 = vmatprep.subr.mxu0 0.0
    %91 = vmatpush1.msra.mxu0 0.0
    %92 = vmatprep.subr.mxu0 0.0
    %93 = vmatpush1.msra.mxu0 0.0
    %94 = vmatprep.subr.mxu0 0.0
    %95 = vmatpush1.msra.mxu0 0.0
    %96 = vmatprep.subr.mxu0 0.0
    %97 = vmatpush1.msra.mxu0 0.0
    %98 = vmatprep.subr.mxu0 0.0
    %99 = vmatpush1.msra.mxu0 0.0
    %100 = vmatprep.subr.mxu0 0.0
    %101 = vmatpush1.msra.mxu0 0.0
    %102 = vmatprep.subr.mxu0 0.0
    %103 = vmatpush1.msra.mxu0 0.0
    %104 = vmatprep.subr.mxu0 0.0
    %105 = vmatpush1.msra.mxu0 0.0
    %106 = vmatprep.subr.mxu0 0.0
    %107 = vmatpush1.msra.mxu0 0.0
    %108 = vmatprep.subr.mxu0 0.0
    %109 = vmatpush1.msra.mxu0 0.0
    %110 = vmatprep.subr.mxu0 0.0
    %111 = vmatpush1.msra.mxu0 0.0
    %112 = vmatprep.mubr.f32.mxu0 0.0
    %113 = vmatmul.mubr.f32.gmra.mrb[0].mxu0 %v46
    %v114 = vpop.f32.mrb[0].mxu0
    %v115 = vadd.f32 0.0, %v114
    %v116 = vpop.f32.mrb[0].mxu0
    %117 = vdwg.mxu0
    %v118 = vadd.f32 %v43, %v115
    %v119 = vxor.u32 %v118, 2147483648
    %v120 = vmul.f32 %v119, 1.442695
    %v121 = vpow.pop %v120
    %v122 = vadd.f32 %v121, 1.0
    %v123 = vrcp.pop %v122
    %v124 = vmul.f32 1.0, %v123
    %v125 = vtanh.pop %v118
    %127 = vrot.lane.b32.xlu0 %v42, 32
    %v128 = vpop.permute.xlu0 %127
    %v130 = vmul.f32 %v124, %v128
    %132 = vrot.lane.b32.xlu0 %v125, 64
    %v133 = vpop.permute.xlu0 %132
    %v135 = vmul.f32 %v124, %v133
    %137 = vrot.lane.b32.xlu0 %v135, 32
    %v138 = vpop.permute.xlu0 %137
    %v140 = vadd.f32 %v130, %v138
    %v141 = vtanh.pop %v140
    %143 = vrot.lane.b32.xlu0 %v141, 64
    %v144 = vpop.permute.xlu0 %143
    %v146 = vmul.f32 %v124, %v144
    %148 = vrot.lane.b32.xlu0 %v146, 32
    %v149 = vpop.permute.xlu0 %148
    %vm151 = vcmask 254976
    %152 = vst.msk [vmem:[#allocation4] sm:$0x3] %vm151, %v149
    %s153 = scalar_lea.vmem %s0, 2
    %v154 = vld [vmem:[%s153] sm:$0x3]
    %v155 = vsel %vm44, %v149, 0
    %157 = vmatprep.subr.mxu0 0.0
    %158 = vmatpush1.msra.mxu0 %v37
    %159 = vmatprep.subr.mxu0 0.0
    %160 = vmatpush1.msra.mxu0 %v38
    %161 = vmatprep.subr.mxu0 0.0
    %162 = vmatpush1.msra.mxu0 %v39
    %163 = vmatprep.subr.mxu0 0.0
    %164 = vmatpush1.msra.mxu0 %v40
    %165 = vmatprep.subr.mxu0 0.0
    %166 = vmatpush1.msra.mxu0 0.0
    %167 = vmatprep.subr.mxu0 0.0
    %168 = vmatpush1.msra.mxu0 0.0
    %169 = vmatprep.subr.mxu0 0.0
    %170 = vmatpush1.msra.mxu0 0.0
    %171 = vmatprep.subr.mxu0 0.0
    %172 = vmatpush1.msra.mxu0 0.0
    %173 = vmatprep.subr.mxu0 0.0
    %174 = vmatpush1.msra.mxu0 0.0
    %175 = vmatprep.subr.mxu0 0.0
    %176 = vmatpush1.msra.mxu0 0.0
    %177 = vmatprep.subr.mxu0 0.0
    %178 = vmatpush1.msra.mxu0 0.0
    %179 = vmatprep.subr.mxu0 0.0
    %180 = vmatpush1.msra.mxu0 0.0
    %181 = vmatprep.subr.mxu0 0.0
    %182 = vmatpush1.msra.mxu0 0.0
    %183 = vmatprep.subr.mxu0 0.0
    %184 = vmatpush1.msra.mxu0 0.0
    %185 = vmatprep.subr.mxu0 0.0
    %186 = vmatpush1.msra.mxu0 0.0
    %187 = vmatprep.subr.mxu0 0.0
    %188 = vmatpush1.msra.mxu0 0.0
    %189 = vmatprep.subr.mxu0 0.0
    %190 = vmatpush1.msra.mxu0 0.0
    %191 = vmatprep.subr.mxu0 0.0
    %192 = vmatpush1.msra.mxu0 0.0
    %193 = vmatprep.subr.mxu0 0.0
    %194 = vmatpush1.msra.mxu0 0.0
    %195 = vmatprep.subr.mxu0 0.0
    %196 = vmatpush1.msra.mxu0 0.0
    %197 = vmatprep.subr.mxu0 0.0
    %198 = vmatpush1.msra.mxu0 0.0
    %199 = vmatprep.subr.mxu0 0.0
    %200 = vmatpush1.msra.mxu0 0.0
    %201 = vmatprep.subr.mxu0 0.0
    %202 = vmatpush1.msra.mxu0 0.0
    %203 = vmatprep.subr.mxu0 0.0
    %204 = vmatpush1.msra.mxu0 0.0
    %205 = vmatprep.subr.mxu0 0.0
    %206 = vmatpush1.msra.mxu0 0.0
    %207 = vmatprep.subr.mxu0 0.0
    %208 = vmatpush1.msra.mxu0 0.0
    %209 = vmatprep.subr.mxu0 0.0
    %210 = vmatpush1.msra.mxu0 0.0
    %211 = vmatprep.subr.mxu0 0.0
    %212 = vmatpush1.msra.mxu0 0.0
    %213 = vmatprep.subr.mxu0 0.0
    %214 = vmatpush1.msra.mxu0 0.0
    %215 = vmatprep.subr.mxu0 0.0
    %216 = vmatpush1.msra.mxu0 0.0
    %217 = vmatprep.subr.mxu0 0.0
    %218 = vmatpush1.msra.mxu0 0.0
    %219 = vmatprep.subr.mxu0 0.0
    %220 = vmatpush1.msra.mxu0 0.0
    %221 = vmatprep.mubr.f32.mxu0 0.0
    %222 = vmatmul.mubr.f32.gmra.mrb[0].mxu0 %v155
    %v223 = vpop.f32.mrb[0].mxu0
    %v224 = vadd.f32 0.0, %v223
    %v225 = vpop.f32.mrb[0].mxu0
    %226 = vdwg.mxu0
    %v227 = vadd.f32 %v154, %v224
    %v228 = vxor.u32 %v227, 2147483648
    %v229 = vmul.f32 %v228, 1.442695
    %v230 = vpow.pop %v229
    %v231 = vadd.f32 %v230, 1.0
    %v232 = vrcp.pop %v231
    %v233 = vmul.f32 1.0, %v232
    %v234 = vtanh.pop %v227
    %v235 = vmul.f32 %v233, %v140
    %237 = vrot.lane.b32.xlu0 %v234, 64
    %v238 = vpop.permute.xlu0 %237
    %v240 = vmul.f32 %v233, %v238
    %242 = vrot.lane.b32.xlu0 %v240, 32
    %v243 = vpop.permute.xlu0 %242
    %v245 = vadd.f32 %v235, %v243
    %v246 = vtanh.pop %v245
    %248 = vrot.lane.b32.xlu0 %v246, 64
    %v249 = vpop.permute.xlu0 %248
    %v251 = vmul.f32 %v233, %v249
    %253 = vrot.lane.b32.xlu0 %v251, 32
    %v254 = vpop.permute.xlu0 %253
    %s256 = scalar_lea.vmem [#allocation4], 2
    %257 = vst.msk [vmem:[%s256] sm:$0x3] %vm151, %v254
    %s258 = scalar_lea.vmem %s0, 4
    %v259 = vld [vmem:[%s258] sm:$0x3]
    %v260 = vsel %vm44, %v254, 0
    %262 = vmatprep.subr.mxu0 0.0
    %263 = vmatpush1.msra.mxu0 %v37
    %264 = vmatprep.subr.mxu0 0.0
    %265 = vmatpush1.msra.mxu0 %v38
    %266 = vmatprep.subr.mxu0 0.0
    %267 = vmatpush1.msra.mxu0 %v39
    %268 = vmatprep.subr.mxu0 0.0
    %269 = vmatpush1.msra.mxu0 %v40
    %270 = vmatprep.subr.mxu0 0.0
    %271 = vmatpush1.msra.mxu0 0.0
    %272 = vmatprep.subr.mxu0 0.0
    %273 = vmatpush1.msra.mxu0 0.0
    %274 = vmatprep.subr.mxu0 0.0
    %275 = vmatpush1.msra.mxu0 0.0
    %276 = vmatprep.subr.mxu0 0.0
    %277 = vmatpush1.msra.mxu0 0.0
    %278 = vmatprep.subr.mxu0 0.0
    %279 = vmatpush1.msra.mxu0 0.0
    %280 = vmatprep.subr.mxu0 0.0
    %281 = vmatpush1.msra.mxu0 0.0
    %282 = vmatprep.subr.mxu0 0.0
    %283 = vmatpush1.msra.mxu0 0.0
    %284 = vmatprep.subr.mxu0 0.0
    %285 = vmatpush1.msra.mxu0 0.0
    %286 = vmatprep.subr.mxu0 0.0
    %287 = vmatpush1.msra.mxu0 0.0
    %288 = vmatprep.subr.mxu0 0.0
    %289 = vmatpush1.msra.mxu0 0.0
    %290 = vmatprep.subr.mxu0 0.0
    %291 = vmatpush1.msra.mxu0 0.0
    %292 = vmatprep.subr.mxu0 0.0
    %293 = vmatpush1.msra.mxu0 0.0
    %294 = vmatprep.subr.mxu0 0.0
    %295 = vmatpush1.msra.mxu0 0.0
    %296 = vmatprep.subr.mxu0 0.0
    %297 = vmatpush1.msra.mxu0 0.0
    %298 = vmatprep.subr.mxu0 0.0
    %299 = vmatpush1.msra.mxu0 0.0
    %300 = vmatprep.subr.mxu0 0.0
    %301 = vmatpush1.msra.mxu0 0.0
    %302 = vmatprep.subr.mxu0 0.0
    %303 = vmatpush1.msra.mxu0 0.0
    %304 = vmatprep.subr.mxu0 0.0
    %305 = vmatpush1.msra.mxu0 0.0
    %306 = vmatprep.subr.mxu0 0.0
    %307 = vmatpush1.msra.mxu0 0.0
    %308 = vmatprep.subr.mxu0 0.0
    %309 = vmatpush1.msra.mxu0 0.0
    %310 = vmatprep.subr.mxu0 0.0
    %311 = vmatpush1.msra.mxu0 0.0
    %312 = vmatprep.subr.mxu0 0.0
    %313 = vmatpush1.msra.mxu0 0.0
    %314 = vmatprep.subr.mxu0 0.0
    %315 = vmatpush1.msra.mxu0 0.0
    %316 = vmatprep.subr.mxu0 0.0
    %317 = vmatpush1.msra.mxu0 0.0
    %318 = vmatprep.subr.mxu0 0.0
    %319 = vmatpush1.msra.mxu0 0.0
    %320 = vmatprep.subr.mxu0 0.0
    %321 = vmatpush1.msra.mxu0 0.0
    %322 = vmatprep.subr.mxu0 0.0
    %323 = vmatpush1.msra.mxu0 0.0
    %324 = vmatprep.subr.mxu0 0.0
    %325 = vmatpush1.msra.mxu0 0.0
    %326 = vmatprep.mubr.f32.mxu0 0.0
    %327 = vmatmul.mubr.f32.gmra.mrb[0].mxu0 %v260
    %v328 = vpop.f32.mrb[0].mxu0
    %v329 = vadd.f32 0.0, %v328
    %v330 = vpop.f32.mrb[0].mxu0
    %331 = vdwg.mxu0
    %v332 = vadd.f32 %v259, %v329
    %v333 = vxor.u32 %v332, 2147483648
    %v334 = vmul.f32 %v333, 1.442695
    %v335 = vpow.pop %v334
    %v336 = vadd.f32 %v335, 1.0
    %v337 = vrcp.pop %v336
    %v338 = vmul.f32 1.0, %v337
    %v339 = vtanh.pop %v332
    %v340 = vmul.f32 %v338, %v245
    %342 = vrot.lane.b32.xlu0 %v339, 64
    %v343 = vpop.permute.xlu0 %342
    %v345 = vmul.f32 %v338, %v343
    %347 = vrot.lane.b32.xlu0 %v345, 32
    %v348 = vpop.permute.xlu0 %347
    %v350 = vadd.f32 %v340, %v348
    %v351 = vtanh.pop %v350
    %353 = vrot.lane.b32.xlu0 %v351, 64
    %v354 = vpop.permute.xlu0 %353
    %v356 = vmul.f32 %v338, %v354
    %358 = vrot.lane.b32.xlu0 %v356, 32
    %v359 = vpop.permute.xlu0 %358
    %s361 = scalar_lea.vmem [#allocation4], 4
    %362 = vst.msk [vmem:[%s361] sm:$0x3] %vm151, %v359
    %s363 = scalar_lea.vmem %s0, 6
    %v364 = vld [vmem:[%s363] sm:$0x3]
    %v365 = vsel %vm44, %v359, 0
    %367 = vmatprep.subr.mxu0 0.0
    %368 = vmatpush1.msra.mxu0 %v37
    %369 = vmatprep.subr.mxu0 0.0
    %370 = vmatpush1.msra.mxu0 %v38
    %371 = vmatprep.subr.mxu0 0.0
    %372 = vmatpush1.msra.mxu0 %v39
    %373 = vmatprep.subr.mxu0 0.0
    %374 = vmatpush1.msra.mxu0 %v40
    %375 = vmatprep.subr.mxu0 0.0
    %376 = vmatpush1.msra.mxu0 0.0
    %377 = vmatprep.subr.mxu0 0.0
    %378 = vmatpush1.msra.mxu0 0.0
    %379 = vmatprep.subr.mxu0 0.0
    %380 = vmatpush1.msra.mxu0 0.0
    %381 = vmatprep.subr.mxu0 0.0
    %382 = vmatpush1.msra.mxu0 0.0
    %383 = vmatprep.subr.mxu0 0.0
    %384 = vmatpush1.msra.mxu0 0.0
    %385 = vmatprep.subr.mxu0 0.0
    %386 = vmatpush1.msra.mxu0 0.0
    %387 = vmatprep.subr.mxu0 0.0
    %388 = vmatpush1.msra.mxu0 0.0
    %389 = vmatprep.subr.mxu0 0.0
    %390 = vmatpush1.msra.mxu0 0.0
    %391 = vmatprep.subr.mxu0 0.0
    %392 = vmatpush1.msra.mxu0 0.0
    %393 = vmatprep.subr.mxu0 0.0
    %394 = vmatpush1.msra.mxu0 0.0
    %395 = vmatprep.subr.mxu0 0.0
    %396 = vmatpush1.msra.mxu0 0.0
    %397 = vmatprep.subr.mxu0 0.0
    %398 = vmatpush1.msra.mxu0 0.0
    %399 = vmatprep.subr.mxu0 0.0
    %400 = vmatpush1.msra.mxu0 0.0
    %401 = vmatprep.subr.mxu0 0.0
    %402 = vmatpush1.msra.mxu0 0.0
    %403 = vmatprep.subr.mxu0 0.0
    %404 = vmatpush1.msra.mxu0 0.0
    %405 = vmatprep.subr.mxu0 0.0
    %406 = vmatpush1.msra.mxu0 0.0
    %407 = vmatprep.subr.mxu0 0.0
    %408 = vmatpush1.msra.mxu0 0.0
    %409 = vmatprep.subr.mxu0 0.0
    %410 = vmatpush1.msra.mxu0 0.0
    %411 = vmatprep.subr.mxu0 0.0
    %412 = vmatpush1.msra.mxu0 0.0
    %413 = vmatprep.subr.mxu0 0.0
    %414 = vmatpush1.msra.mxu0 0.0
    %415 = vmatprep.subr.mxu0 0.0
    %416 = vmatpush1.msra.mxu0 0.0
    %417 = vmatprep.subr.mxu0 0.0
    %418 = vmatpush1.msra.mxu0 0.0
    %419 = vmatprep.subr.mxu0 0.0
    %420 = vmatpush1.msra.mxu0 0.0
    %421 = vmatprep.subr.mxu0 0.0
    %422 = vmatpush1.msra.mxu0 0.0
    %423 = vmatprep.subr.mxu0 0.0
    %424 = vmatpush1.msra.mxu0 0.0
    %425 = vmatprep.subr.mxu0 0.0
    %426 = vmatpush1.msra.mxu0 0.0
    %427 = vmatprep.subr.mxu0 0.0
    %428 = vmatpush1.msra.mxu0 0.0
    %429 = vmatprep.subr.mxu0 0.0
    %430 = vmatpush1.msra.mxu0 0.0
    %431 = vmatprep.mubr.f32.mxu0 0.0
    %432 = vmatmul.mubr.f32.gmra.mrb[0].mxu0 %v365
    %v433 = vpop.f32.mrb[0].mxu0
    %v434 = vadd.f32 0.0, %v433
    %v435 = vpop.f32.mrb[0].mxu0
    %436 = vdwg.mxu0
    %v437 = vadd.f32 %v364, %v434
    %v438 = vxor.u32 %v437, 2147483648
    %v439 = vmul.f32 %v438, 1.442695
    %v440 = vpow.pop %v439
    %v441 = vadd.f32 %v440, 1.0
    %v442 = vrcp.pop %v441
    %v443 = vmul.f32 1.0, %v442
    %v444 = vtanh.pop %v437
    %v445 = vmul.f32 %v443, %v350
    %447 = vrot.lane.b32.xlu0 %v444, 64
    %v448 = vpop.permute.xlu0 %447
    %v450 = vmul.f32 %v443, %v448
    %452 = vrot.lane.b32.xlu0 %v450, 32
    %v453 = vpop.permute.xlu0 %452
    %v455 = vadd.f32 %v445, %v453
    %v456 = vtanh.pop %v455
    %458 = vrot.lane.b32.xlu0 %v456, 64
    %v459 = vpop.permute.xlu0 %458
    %v461 = vmul.f32 %v443, %v459
    %463 = vrot.lane.b32.xlu0 %v461, 32
    %v464 = vpop.permute.xlu0 %463
    %s466 = scalar_lea.vmem [#allocation4], 6
    %467 = vst.msk [vmem:[%s466] sm:$0x3] %vm151, %v464
    %s468 = scalar_lea.vmem %s0, 8
    %v469 = vld [vmem:[%s468] sm:$0x3]
    %v470 = vsel %vm44, %v464, 0
    %472 = vmatprep.subr.mxu0 0.0
    %473 = vmatpush1.msra.mxu0 %v37
    %474 = vmatprep.subr.mxu0 0.0
    %475 = vmatpush1.msra.mxu0 %v38
    %476 = vmatprep.subr.mxu0 0.0
    %477 = vmatpush1.msra.mxu0 %v39
    %478 = vmatprep.subr.mxu0 0.0
    %479 = vmatpush1.msra.mxu0 %v40
    %480 = vmatprep.subr.mxu0 0.0
    %481 = vmatpush1.msra.mxu0 0.0
    %482 = vmatprep.subr.mxu0 0.0
    %483 = vmatpush1.msra.mxu0 0.0
    %484 = vmatprep.subr.mxu0 0.0
    %485 = vmatpush1.msra.mxu0 0.0
    %486 = vmatprep.subr.mxu0 0.0
    %487 = vmatpush1.msra.mxu0 0.0
    %488 = vmatprep.subr.mxu0 0.0
    %489 = vmatpush1.msra.mxu0 0.0
    %490 = vmatprep.subr.mxu0 0.0
    %491 = vmatpush1.msra.mxu0 0.0
    %492 = vmatprep.subr.mxu0 0.0
    %493 = vmatpush1.msra.mxu0 0.0
    %494 = vmatprep.subr.mxu0 0.0
    %495 = vmatpush1.msra.mxu0 0.0
    %496 = vmatprep.subr.mxu0 0.0
    %497 = vmatpush1.msra.mxu0 0.0
    %498 = vmatprep.subr.mxu0 0.0
    %499 = vmatpush1.msra.mxu0 0.0
    %500 = vmatprep.subr.mxu0 0.0
    %501 = vmatpush1.msra.mxu0 0.0
    %502 = vmatprep.subr.mxu0 0.0
    %503 = vmatpush1.msra.mxu0 0.0
    %504 = vmatprep.subr.mxu0 0.0
    %505 = vmatpush1.msra.mxu0 0.0
    %506 = vmatprep.subr.mxu0 0.0
    %507 = vmatpush1.msra.mxu0 0.0
    %508 = vmatprep.subr.mxu0 0.0
    %509 = vmatpush1.msra.mxu0 0.0
    %510 = vmatprep.subr.mxu0 0.0
    %511 = vmatpush1.msra.mxu0 0.0
    %512 = vmatprep.subr.mxu0 0.0
    %513 = vmatpush1.msra.mxu0 0.0
    %514 = vmatprep.subr.mxu0 0.0
    %515 = vmatpush1.msra.mxu0 0.0
    %516 = vmatprep.subr.mxu0 0.0
    %517 = vmatpush1.msra.mxu0 0.0
    %518 = vmatprep.subr.mxu0 0.0
    %519 = vmatpush1.msra.mxu0 0.0
    %520 = vmatprep.subr.mxu0 0.0
    %521 = vmatpush1.msra.mxu0 0.0
    %522 = vmatprep.subr.mxu0 0.0
    %523 = vmatpush1.msra.mxu0 0.0
    %524 = vmatprep.subr.mxu0 0.0
    %525 = vmatpush1.msra.mxu0 0.0
    %526 = vmatprep.subr.mxu0 0.0
    %527 = vmatpush1.msra.mxu0 0.0
    %528 = vmatprep.subr.mxu0 0.0
    %529 = vmatpush1.msra.mxu0 0.0
    %530 = vmatprep.subr.mxu0 0.0
    %531 = vmatpush1.msra.mxu0 0.0
    %532 = vmatprep.subr.mxu0 0.0
    %533 = vmatpush1.msra.mxu0 0.0
    %534 = vmatprep.subr.mxu0 0.0
    %535 = vmatpush1.msra.mxu0 0.0
    %536 = vmatprep.mubr.f32.mxu0 0.0
    %537 = vmatmul.mubr.f32.gmra.mrb[0].mxu0 %v470
    %v538 = vpop.f32.mrb[0].mxu0
    %v539 = vadd.f32 0.0, %v538
    %v540 = vpop.f32.mrb[0].mxu0
    %541 = vdwg.mxu0
    %v542 = vadd.f32 %v469, %v539
    %v543 = vxor.u32 %v542, 2147483648
    %v544 = vmul.f32 %v543, 1.442695
    %v545 = vpow.pop %v544
    %v546 = vadd.f32 %v545, 1.0
    %v547 = vrcp.pop %v546
    %v548 = vmul.f32 1.0, %v547
    %v549 = vtanh.pop %v542
    %v550 = vmul.f32 %v548, %v455
    %552 = vrot.lane.b32.xlu0 %v549, 64
    %v553 = vpop.permute.xlu0 %552
    %v555 = vmul.f32 %v548, %v553
    %557 = vrot.lane.b32.xlu0 %v555, 32
    %v558 = vpop.permute.xlu0 %557
    %v560 = vadd.f32 %v550, %v558
    %v561 = vtanh.pop %v560
    %563 = vrot.lane.b32.xlu0 %v561, 64
    %v564 = vpop.permute.xlu0 %563
    %v566 = vmul.f32 %v548, %v564
    %568 = vrot.lane.b32.xlu0 %v566, 32
    %v569 = vpop.permute.xlu0 %568
    %s571 = scalar_lea.vmem [#allocation4], 8
    %572 = vst.msk [vmem:[%s571] sm:$0x3] %vm151, %v569
    %s573 = scalar_lea.vmem %s0, 10
    %v574 = vld [vmem:[%s573] sm:$0x3]
    %v575 = vsel %vm44, %v569, 0
    %577 = vmatprep.subr.mxu0 0.0
    %578 = vmatpush1.msra.mxu0 %v37
    %579 = vmatprep.subr.mxu0 0.0
    %580 = vmatpush1.msra.mxu0 %v38
    %581 = vmatprep.subr.mxu0 0.0
    %582 = vmatpush1.msra.mxu0 %v39
    %583 = vmatprep.subr.mxu0 0.0
    %584 = vmatpush1.msra.mxu0 %v40
    %585 = vmatprep.subr.mxu0 0.0
    %586 = vmatpush1.msra.mxu0 0.0
    %587 = vmatprep.subr.mxu0 0.0
    %588 = vmatpush1.msra.mxu0 0.0
    %589 = vmatprep.subr.mxu0 0.0
    %590 = vmatpush1.msra.mxu0 0.0
    %591 = vmatprep.subr.mxu0 0.0
    %592 = vmatpush1.msra.mxu0 0.0
    %593 = vmatprep.subr.mxu0 0.0
    %594 = vmatpush1.msra.mxu0 0.0
    %595 = vmatprep.subr.mxu0 0.0
    %596 = vmatpush1.msra.mxu0 0.0
    %597 = vmatprep.subr.mxu0 0.0
    %598 = vmatpush1.msra.mxu0 0.0
    %599 = vmatprep.subr.mxu0 0.0
    %600 = vmatpush1.msra.mxu0 0.0
    %601 = vmatprep.subr.mxu0 0.0
    %602 = vmatpush1.msra.mxu0 0.0
    %603 = vmatprep.subr.mxu0 0.0
    %604 = vmatpush1.msra.mxu0 0.0
    %605 = vmatprep.subr.mxu0 0.0
    %606 = vmatpush1.msra.mxu0 0.0
    %607 = vmatprep.subr.mxu0 0.0
    %608 = vmatpush1.msra.mxu0 0.0
    %609 = vmatprep.subr.mxu0 0.0
    %610 = vmatpush1.msra.mxu0 0.0
    %611 = vmatprep.subr.mxu0 0.0
    %612 = vmatpush1.msra.mxu0 0.0
    %613 = vmatprep.subr.mxu0 0.0
    %614 = vmatpush1.msra.mxu0 0.0
    %615 = vmatprep.subr.mxu0 0.0
    %616 = vmatpush1.msra.mxu0 0.0
    %617 = vmatprep.subr.mxu0 0.0
    %618 = vmatpush1.msra.mxu0 0.0
    %619 = vmatprep.subr.mxu0 0.0
    %620 = vmatpush1.msra.mxu0 0.0
    %621 = vmatprep.subr.mxu0 0.0
    %622 = vmatpush1.msra.mxu0 0.0
    %623 = vmatprep.subr.mxu0 0.0
    %624 = vmatpush1.msra.mxu0 0.0
    %625 = vmatprep.subr.mxu0 0.0
    %626 = vmatpush1.msra.mxu0 0.0
    %627 = vmatprep.subr.mxu0 0.0
    %628 = vmatpush1.msra.mxu0 0.0
    %629 = vmatprep.subr.mxu0 0.0
    %630 = vmatpush1.msra.mxu0 0.0
    %631 = vmatprep.subr.mxu0 0.0
    %632 = vmatpush1.msra.mxu0 0.0
    %633 = vmatprep.subr.mxu0 0.0
    %634 = vmatpush1.msra.mxu0 0.0
    %635 = vmatprep.subr.mxu0 0.0
    %636 = vmatpush1.msra.mxu0 0.0
    %637 = vmatprep.subr.mxu0 0.0
    %638 = vmatpush1.msra.mxu0 0.0
    %639 = vmatprep.subr.mxu0 0.0
    %640 = vmatpush1.msra.mxu0 0.0
    %641 = vmatprep.mubr.f32.mxu0 0.0
    %642 = vmatmul.mubr.f32.gmra.mrb[0].mxu0 %v575
    %v643 = vpop.f32.mrb[0].mxu0
    %v644 = vadd.f32 0.0, %v643
    %v645 = vpop.f32.mrb[0].mxu0
    %646 = vdwg.mxu0
    %v647 = vadd.f32 %v574, %v644
    %v648 = vxor.u32 %v647, 2147483648
    %v649 = vmul.f32 %v648, 1.442695
    %v650 = vpow.pop %v649
    %v651 = vadd.f32 %v650, 1.0
    %v652 = vrcp.pop %v651
    %v653 = vmul.f32 1.0, %v652
    %v654 = vtanh.pop %v647
    %v655 = vmul.f32 %v653, %v560
    %657 = vrot.lane.b32.xlu0 %v654, 64
    %v658 = vpop.permute.xlu0 %657
    %v660 = vmul.f32 %v653, %v658
    %662 = vrot.lane.b32.xlu0 %v660, 32
    %v663 = vpop.permute.xlu0 %662
    %v665 = vadd.f32 %v655, %v663
    %v666 = vtanh.pop %v665
    %668 = vrot.lane.b32.xlu0 %v666, 64
    %v669 = vpop.permute.xlu0 %668
    %v671 = vmul.f32 %v653, %v669
    %673 = vrot.lane.b32.xlu0 %v671, 32
    %v674 = vpop.permute.xlu0 %673
    %s676 = scalar_lea.vmem [#allocation4], 10
    %677 = vst.msk [vmem:[%s676] sm:$0x3] %vm151, %v674
    %s678 = scalar_lea.vmem %s0, 12
    %v679 = vld [vmem:[%s678] sm:$0x3]
    %v680 = vsel %vm44, %v674, 0
    %682 = vmatprep.subr.mxu0 0.0
    %683 = vmatpush1.msra.mxu0 %v37
    %684 = vmatprep.subr.mxu0 0.0
    %685 = vmatpush1.msra.mxu0 %v38
    %686 = vmatprep.subr.mxu0 0.0
    %687 = vmatpush1.msra.mxu0 %v39
    %688 = vmatprep.subr.mxu0 0.0
    %689 = vmatpush1.msra.mxu0 %v40
    %690 = vmatprep.subr.mxu0 0.0
    %691 = vmatpush1.msra.mxu0 0.0
    %692 = vmatprep.subr.mxu0 0.0
    %693 = vmatpush1.msra.mxu0 0.0
    %694 = vmatprep.subr.mxu0 0.0
    %695 = vmatpush1.msra.mxu0 0.0
    %696 = vmatprep.subr.mxu0 0.0
    %697 = vmatpush1.msra.mxu0 0.0
    %698 = vmatprep.subr.mxu0 0.0
    %699 = vmatpush1.msra.mxu0 0.0
    %700 = vmatprep.subr.mxu0 0.0
    %701 = vmatpush1.msra.mxu0 0.0
    %702 = vmatprep.subr.mxu0 0.0
    %703 = vmatpush1.msra.mxu0 0.0
    %704 = vmatprep.subr.mxu0 0.0
    %705 = vmatpush1.msra.mxu0 0.0
    %706 = vmatprep.subr.mxu0 0.0
    %707 = vmatpush1.msra.mxu0 0.0
    %708 = vmatprep.subr.mxu0 0.0
    %709 = vmatpush1.msra.mxu0 0.0
    %710 = vmatprep.subr.mxu0 0.0
    %711 = vmatpush1.msra.mxu0 0.0
    %712 = vmatprep.subr.mxu0 0.0
    %713 = vmatpush1.msra.mxu0 0.0
    %714 = vmatprep.subr.mxu0 0.0
    %715 = vmatpush1.msra.mxu0 0.0
    %716 = vmatprep.subr.mxu0 0.0
    %717 = vmatpush1.msra.mxu0 0.0
    %718 = vmatprep.subr.mxu0 0.0
    %719 = vmatpush1.msra.mxu0 0.0
    %720 = vmatprep.subr.mxu0 0.0
    %721 = vmatpush1.msra.mxu0 0.0
    %722 = vmatprep.subr.mxu0 0.0
    %723 = vmatpush1.msra.mxu0 0.0
    %724 = vmatprep.subr.mxu0 0.0
    %725 = vmatpush1.msra.mxu0 0.0
    %726 = vmatprep.subr.mxu0 0.0
    %727 = vmatpush1.msra.mxu0 0.0
    %728 = vmatprep.subr.mxu0 0.0
    %729 = vmatpush1.msra.mxu0 0.0
    %730 = vmatprep.subr.mxu0 0.0
    %731 = vmatpush1.msra.mxu0 0.0
    %732 = vmatprep.subr.mxu0 0.0
    %733 = vmatpush1.msra.mxu0 0.0
    %734 = vmatprep.subr.mxu0 0.0
    %735 = vmatpush1.msra.mxu0 0.0
    %736 = vmatprep.subr.mxu0 0.0
    %737 = vmatpush1.msra.mxu0 0.0
    %738 = vmatprep.subr.mxu0 0.0
    %739 = vmatpush1.msra.mxu0 0.0
    %740 = vmatprep.subr.mxu0 0.0
    %741 = vmatpush1.msra.mxu0 0.0
    %742 = vmatprep.subr.mxu0 0.0
    %743 = vmatpush1.msra.mxu0 0.0
    %744 = vmatprep.subr.mxu0 0.0
    %745 = vmatpush1.msra.mxu0 0.0
    %746 = vmatprep.mubr.f32.mxu0 0.0
    %747 = vmatmul.mubr.f32.gmra.mrb[0].mxu0 %v680
    %v748 = vpop.f32.mrb[0].mxu0
    %v749 = vadd.f32 0.0, %v748
    %v750 = vpop.f32.mrb[0].mxu0
    %751 = vdwg.mxu0
    %v752 = vadd.f32 %v679, %v749
    %v753 = vxor.u32 %v752, 2147483648
    %v754 = vmul.f32 %v753, 1.442695
    %v755 = vpow.pop %v754
    %v756 = vadd.f32 %v755, 1.0
    %v757 = vrcp.pop %v756
    %v758 = vmul.f32 1.0, %v757
    %v759 = vtanh.pop %v752
    %v760 = vmul.f32 %v758, %v665
    %762 = vrot.lane.b32.xlu0 %v759, 64
    %v763 = vpop.permute.xlu0 %762
    %v765 = vmul.f32 %v758, %v763
    %767 = vrot.lane.b32.xlu0 %v765, 32
    %v768 = vpop.permute.xlu0 %767
    %v770 = vadd.f32 %v760, %v768
    %v771 = vtanh.pop %v770
    %773 = vrot.lane.b32.xlu0 %v771, 64
    %v774 = vpop.permute.xlu0 %773
    %v776 = vmul.f32 %v758, %v774
    %778 = vrot.lane.b32.xlu0 %v776, 32
    %v779 = vpop.permute.xlu0 %778
    %s781 = scalar_lea.vmem [#allocation4], 12
    %782 = vst.msk [vmem:[%s781] sm:$0x3] %vm151, %v779
    %s783 = scalar_lea.vmem %s0, 14
    %v784 = vld [vmem:[%s783] sm:$0x3]
    %v785 = vsel %vm44, %v779, 0
    %787 = vmatprep.subr.mxu0 0.0
    %788 = vmatpush1.msra.mxu0 %v37
    %789 = vmatprep.subr.mxu0 0.0
    %790 = vmatpush1.msra.mxu0 %v38
    %791 = vmatprep.subr.mxu0 0.0
    %792 = vmatpush1.msra.mxu0 %v39
    %793 = vmatprep.subr.mxu0 0.0
    %794 = vmatpush1.msra.mxu0 %v40
    %795 = vmatprep.subr.mxu0 0.0
    %796 = vmatpush1.msra.mxu0 0.0
    %797 = vmatprep.subr.mxu0 0.0
    %798 = vmatpush1.msra.mxu0 0.0
    %799 = vmatprep.subr.mxu0 0.0
    %800 = vmatpush1.msra.mxu0 0.0
    %801 = vmatprep.subr.mxu0 0.0
    %802 = vmatpush1.msra.mxu0 0.0
    %803 = vmatprep.subr.mxu0 0.0
    %804 = vmatpush1.msra.mxu0 0.0
    %805 = vmatprep.subr.mxu0 0.0
    %806 = vmatpush1.msra.mxu0 0.0
    %807 = vmatprep.subr.mxu0 0.0
    %808 = vmatpush1.msra.mxu0 0.0
    %809 = vmatprep.subr.mxu0 0.0
    %810 = vmatpush1.msra.mxu0 0.0
    %811 = vmatprep.subr.mxu0 0.0
    %812 = vmatpush1.msra.mxu0 0.0
    %813 = vmatprep.subr.mxu0 0.0
    %814 = vmatpush1.msra.mxu0 0.0
    %815 = vmatprep.subr.mxu0 0.0
    %816 = vmatpush1.msra.mxu0 0.0
    %817 = vmatprep.subr.mxu0 0.0
    %818 = vmatpush1.msra.mxu0 0.0
    %819 = vmatprep.subr.mxu0 0.0
    %820 = vmatpush1.msra.mxu0 0.0
    %821 = vmatprep.subr.mxu0 0.0
    %822 = vmatpush1.msra.mxu0 0.0
    %823 = vmatprep.subr.mxu0 0.0
    %824 = vmatpush1.msra.mxu0 0.0
    %825 = vmatprep.subr.mxu0 0.0
    %826 = vmatpush1.msra.mxu0 0.0
    %827 = vmatprep.subr.mxu0 0.0
    %828 = vmatpush1.msra.mxu0 0.0
    %829 = vmatprep.subr.mxu0 0.0
    %830 = vmatpush1.msra.mxu0 0.0
    %831 = vmatprep.subr.mxu0 0.0
    %832 = vmatpush1.msra.mxu0 0.0
    %833 = vmatprep.subr.mxu0 0.0
    %834 = vmatpush1.msra.mxu0 0.0
    %835 = vmatprep.subr.mxu0 0.0
    %836 = vmatpush1.msra.mxu0 0.0
    %837 = vmatprep.subr.mxu0 0.0
    %838 = vmatpush1.msra.mxu0 0.0
    %839 = vmatprep.subr.mxu0 0.0
    %840 = vmatpush1.msra.mxu0 0.0
    %841 = vmatprep.subr.mxu0 0.0
    %842 = vmatpush1.msra.mxu0 0.0
    %843 = vmatprep.subr.mxu0 0.0
    %844 = vmatpush1.msra.mxu0 0.0
    %845 = vmatprep.subr.mxu0 0.0
    %846 = vmatpush1.msra.mxu0 0.0
    %847 = vmatprep.subr.mxu0 0.0
    %848 = vmatpush1.msra.mxu0 0.0
    %849 = vmatprep.subr.mxu0 0.0
    %850 = vmatpush1.msra.mxu0 0.0
    %851 = vmatprep.mubr.f32.mxu0 0.0
    %852 = vmatmul.mubr.f32.gmra.mrb[0].mxu0 %v785
    %v853 = vpop.f32.mrb[0].mxu0
    %v854 = vadd.f32 0.0, %v853
    %v855 = vpop.f32.mrb[0].mxu0
    %856 = vdwg.mxu0
    %v857 = vadd.f32 %v784, %v854
    %v858 = vxor.u32 %v857, 2147483648
    %v859 = vmul.f32 %v858, 1.442695
    %v860 = vpow.pop %v859
    %v861 = vadd.f32 %v860, 1.0
    %v862 = vrcp.pop %v861
    %v863 = vmul.f32 1.0, %v862
    %v864 = vtanh.pop %v857
    %v865 = vmul.f32 %v863, %v770
    %867 = vrot.lane.b32.xlu0 %v864, 64
    %v868 = vpop.permute.xlu0 %867
    %v870 = vmul.f32 %v863, %v868
    %872 = vrot.lane.b32.xlu0 %v870, 32
    %v873 = vpop.permute.xlu0 %872
    %v875 = vadd.f32 %v865, %v873
    %v876 = vtanh.pop %v875
    %878 = vrot.lane.b32.xlu0 %v876, 64
    %v879 = vpop.permute.xlu0 %878
    %v881 = vmul.f32 %v863, %v879
    %883 = vrot.lane.b32.xlu0 %v881, 32
    %v884 = vpop.permute.xlu0 %883
    %s886 = scalar_lea.vmem [#allocation4], 14
    %887 = vst.msk [vmem:[%s886] sm:$0x3] %vm151, %v884
    %888 = vst.msk [vmem:[#allocation2] sm:$0x3] %vm151, %v884
    %890 = vrot.lane.b32.xlu0 %v875, 96
    %v891 = vpop.permute.xlu0 %890
    %893 = vst.msk [vmem:[#allocation3] sm:$0x3] %vm151, %v891
    %v894 = vld [vmem:[#allocation4] sm:$0x3]
    %v895 = vld [vmem:[#allocation4 + $0x2] sm:$0x3]
    %v896 = vld [vmem:[#allocation4 + $0x4] sm:$0x3]
    %v897 = vld [vmem:[#allocation4 + $0x6] sm:$0x3]
    %v898 = vld [vmem:[#allocation4 + $0x8] sm:$0x3]
    %v899 = vld [vmem:[#allocation4 + $0xa] sm:$0x3]
    %v900 = vld [vmem:[#allocation4 + $0xc] sm:$0x3]
    %v901 = vld [vmem:[#allocation4 + $0xe] sm:$0x3]
    %v902 = vld [vmem:[%s2] sm:$0xff]
    %v903 = vld [vmem:[%s2 + $0x8] sm:$0xff]
    %v904 = vld [vmem:[%s2 + $0x10] sm:$0xff]
    %v905 = vld [vmem:[%s2 + $0x18] sm:$0xff]
    %v906 = vld [vmem:[%s3] sm:$0x1]
    %v908 = vlaneseq
    %v909 = vshrl.u32 %v908, 7
    %v910 = vsub.s32 0, %v909
    %v911 = vrot.slane %v906, %v910
    %v921 = vcombine.low %v894, %v895
    %v922 = vcombine.low %v896, %v897
    %v924 = vunpack.c.l.s4 1983009808
    %v925 = vunpack.c.0.s8 %v924
    %v926 = vlaneseq
    %v927 = vshrl.u32 %v926, 7
    %v928 = vsub.s32 %v925, %v927
    %v929 = vrot.slane %v921, %v928
    %v931 = vunpack.c.l.s4 1983009808
    %v932 = vunpack.c.0.s8 %v931
    %v933 = vlaneseq
    %v934 = vshrl.u32 %v933, 7
    %v935 = vsub.s32 %v932, %v934
    %v936 = vrot.slane %v922, %v935
    %v937 = vcombine.low %v929, %v936
    %v938 = vcombine.low %v898, %v899
    %v939 = vcombine.low %v900, %v901
    %v941 = vunpack.c.l.s4 1983009808
    %v942 = vunpack.c.0.s8 %v941
    %v943 = vlaneseq
    %v944 = vshrl.u32 %v943, 7
    %v945 = vsub.s32 %v942, %v944
    %v946 = vrot.slane %v938, %v945
    %v948 = vunpack.c.l.s4 1983009808
    %v949 = vunpack.c.0.s8 %v948
    %v950 = vlaneseq
    %v951 = vshrl.u32 %v950, 7
    %v952 = vsub.s32 %v949, %v951
    %v953 = vrot.slane %v939, %v952
    %v954 = vcombine.low %v946, %v953
    %v955 = vsel %vm44, %v937, 0
    %v957 = vsel %vm44, %v954, 0
    %959 = vmatprep.subr.mxu0 0.0
    %960 = vmatpush1.msra.mxu0 %v902
    %961 = vmatprep.subr.mxu0 0.0
    %962 = vmatpush1.msra.mxu0 %v903
    %963 = vmatprep.subr.mxu0 0.0
    %964 = vmatpush1.msra.mxu0 %v904
    %965 = vmatprep.subr.mxu0 0.0
    %966 = vmatpush1.msra.mxu0 %v905
    %967 = vmatprep.subr.mxu0 0.0
    %968 = vmatpush1.msra.mxu0 0.0
    %969 = vmatprep.subr.mxu0 0.0
    %970 = vmatpush1.msra.mxu0 0.0
    %971 = vmatprep.subr.mxu0 0.0
    %972 = vmatpush1.msra.mxu0 0.0
    %973 = vmatprep.subr.mxu0 0.0
    %974 = vmatpush1.msra.mxu0 0.0
    %975 = vmatprep.subr.mxu0 0.0
    %976 = vmatpush1.msra.mxu0 0.0
    %977 = vmatprep.subr.mxu0 0.0
    %978 = vmatpush1.msra.mxu0 0.0
    %979 = vmatprep.subr.mxu0 0.0
    %980 = vmatpush1.msra.mxu0 0.0
    %981 = vmatprep.subr.mxu0 0.0
    %982 = vmatpush1.msra.mxu0 0.0
    %983 = vmatprep.subr.mxu0 0.0
    %984 = vmatpush1.msra.mxu0 0.0
    %985 = vmatprep.subr.mxu0 0.0
    %986 = vmatpush1.msra.mxu0 0.0
    %987 = vmatprep.subr.mxu0 0.0
    %988 = vmatpush1.msra.mxu0 0.0
    %989 = vmatprep.subr.mxu0 0.0
    %990 = vmatpush1.msra.mxu0 0.0
    %991 = vmatprep.subr.mxu0 0.0
    %992 = vmatpush1.msra.mxu0 0.0
    %993 = vmatprep.subr.mxu0 0.0
    %994 = vmatpush1.msra.mxu0 0.0
    %995 = vmatprep.subr.mxu0 0.0
    %996 = vmatpush1.msra.mxu0 0.0
    %997 = vmatprep.subr.mxu0 0.0
    %998 = vmatpush1.msra.mxu0 0.0
    %999 = vmatprep.subr.mxu0 0.0
    %1000 = vmatpush1.msra.mxu0 0.0
    %1001 = vmatprep.subr.mxu0 0.0
    %1002 = vmatpush1.msra.mxu0 0.0
    %1003 = vmatprep.subr.mxu0 0.0
    %1004 = vmatpush1.msra.mxu0 0.0
    %1005 = vmatprep.subr.mxu0 0.0
    %1006 = vmatpush1.msra.mxu0 0.0
    %1007 = vmatprep.subr.mxu0 0.0
    %1008 = vmatpush1.msra.mxu0 0.0
    %1009 = vmatprep.subr.mxu0 0.0
    %1010 = vmatpush1.msra.mxu0 0.0
    %1011 = vmatprep.subr.mxu0 0.0
    %1012 = vmatpush1.msra.mxu0 0.0
    %1013 = vmatprep.subr.mxu0 0.0
    %1014 = vmatpush1.msra.mxu0 0.0
    %1015 = vmatprep.subr.mxu0 0.0
    %1016 = vmatpush1.msra.mxu0 0.0
    %1017 = vmatprep.subr.mxu0 0.0
    %1018 = vmatpush1.msra.mxu0 0.0
    %1019 = vmatprep.subr.mxu0 0.0
    %1020 = vmatpush1.msra.mxu0 0.0
    %1021 = vmatprep.subr.mxu0 0.0
    %1022 = vmatpush1.msra.mxu0 0.0
    %1023 = vmatprep.mubr.f32.mxu0 0.0
    %1024 = vmatmul.mubr.f32.gmra.mrb[0].mxu0 %v955
    %v1025 = vpop.f32.mrb[0].mxu0
    %v1026 = vadd.f32 %v911, %v1025
    %v1027 = vpop.f32.mrb[0].mxu0
    %1028 = vmatprep.mubr.f32.mxu0 0.0
    %1029 = vmatmul.mubr.f32.gmra.mrb[0].mxu0 %v957
    %v1030 = vpop.f32.mrb[0].mxu0
    %v1031 = vadd.f32 %v911, %v1030
    %v1032 = vpop.f32.mrb[0].mxu0
    %1033 = vdwg.mxu0
    %v1036 = vcombine.high %v1026, %v1026
    %v1038 = vunpack.c.l.s4 1983009808
    %v1039 = vunpack.c.0.s8 %v1038
    %v1040 = vlaneseq
    %v1041 = vshrl.u32 %v1040, 7
    %v1042 = vsub.s32 %v1039, %v1041
    %v1043 = vrot.slane %v1026, %v1042
    %v1045 = vunpack.c.l.s4 1983009808
    %v1046 = vunpack.c.0.s8 %v1045
    %v1047 = vlaneseq
    %v1048 = vshrl.u32 %v1047, 7
    %v1049 = vsub.s32 %v1046, %v1048
    %v1050 = vrot.slane %v1036, %v1049
    %v1051 = vcombine.high %v1043, %v1043
    %v1052 = vcombine.high %v1050, %v1050
    %v1053 = vcombine.high %v1031, %v1031
    %v1055 = vunpack.c.l.s4 1983009808
    %v1056 = vunpack.c.0.s8 %v1055
    %v1057 = vlaneseq
    %v1058 = vshrl.u32 %v1057, 7
    %v1059 = vsub.s32 %v1056, %v1058
    %v1060 = vrot.slane %v1031, %v1059
    %v1062 = vunpack.c.l.s4 1983009808
    %v1063 = vunpack.c.0.s8 %v1062
    %v1064 = vlaneseq
    %v1065 = vshrl.u32 %v1064, 7
    %v1066 = vsub.s32 %v1063, %v1065
    %v1067 = vrot.slane %v1053, %v1066
    %v1068 = vcombine.high %v1060, %v1060
    %v1069 = vcombine.high %v1067, %v1067
    %vm1078 = vcmask 123904
    %1079 = vst.msk [vmem:[%s6] sm:$0x3] %vm1078, %v1043
    %1080 = vst.msk [vmem:[%s6 + $0x2] sm:$0x3] %vm1078, %v1051
    %1081 = vst.msk [vmem:[%s6 + $0x4] sm:$0x3] %vm1078, %v1050
    %1082 = vst.msk [vmem:[%s6 + $0x6] sm:$0x3] %vm1078, %v1052
    %1083 = vst.msk [vmem:[%s6 + $0x8] sm:$0x3] %vm1078, %v1060
    %1084 = vst.msk [vmem:[%s6 + $0xa] sm:$0x3] %vm1078, %v1068
    %1085 = vst.msk [vmem:[%s6 + $0xc] sm:$0x3] %vm1078, %v1067
    %1086 = vst.msk [vmem:[%s6 + $0xe] sm:$0x3] %vm1078, %v1069
    // Predicated region
    $region30: #{decoder_forward.1} parent=1 // pred_check
      %p1087 = pneg %p28
    $region31: #{decoder_forward.1} parent=1 // pred_check_branch
      %1089 = sbr.rel (%p1087) target = $region33
    $region32: #{decoder_forward.1} parent=1 // pred_region
      %1090 = vst.msk [vmem:[#allocation5] sm:$0x3] %vm151, %v884
      %1091 = vst.msk [vmem:[#allocation7] sm:$0x3] %vm151, %v891
    $region33: #{decoder_forward.1} parent=1 // pred_fallthru
      _
    // Predicated region
    $region34: #{decoder_forward.1} parent=1 // pred_check
      _
    $region35: #{decoder_forward.1} parent=1 // pred_check_branch
      %1093 = sbr.rel (0) target = $region37
    $region36: #{decoder_forward.1} parent=1 // pred_region
      _
    $region37: #{decoder_forward.1} parent=1 // pred_fallthru
      _
    // Predicated region
    $region38: #{decoder_forward.1} parent=1 // pred_check
      _
    $region39: #{decoder_forward.1} parent=1 // pred_check_branch
      %1095 = sbr.rel (0) target = $region41
    $region40: #{decoder_forward.1} parent=1 // pred_region
      %s1097 = ssub.s32 32, 32
      %1098 = vsyncadd [#allocation6], %s1097
      %s1100 = sshll.u32 [#allocation5], 4
      %s1101 = int_to_ptr.vmem [resolvable:$true] %s1100
      %1103 = dma.vmem_to_hbm [thread:$0]  %s1101, 32, %s7, [#allocation6]
    $region41: #{decoder_forward.1} parent=1 // pred_fallthru
      _
    // Predicated region
    $region42: #{decoder_forward.1} parent=1 // pred_check
      _
    $region43: #{decoder_forward.1} parent=1 // pred_check_branch
      %1105 = sbr.rel (0) target = $region45
    $region44: #{decoder_forward.1} parent=1 // pred_region
      %s1107 = ssub.s32 32, 32
      %1108 = vsyncadd [#allocation8], %s1107
      %s1110 = sshll.u32 [#allocation7], 4
      %s1111 = int_to_ptr.vmem [resolvable:$true] %s1110
      %1113 = dma.vmem_to_hbm [thread:$0]  %s1111, 32, %s8, [#allocation8]
    $region45: #{decoder_forward.1} parent=1 // pred_fallthru
      _
    // Predicated region
    $region46: #{decoder_forward.1} parent=1 // pred_check
      _
    $region47: #{decoder_forward.1} parent=1 // pred_check_branch
      %1115 = sbr.rel (0) target = $region49
    $region48: #{decoder_forward.1} parent=1 // pred_region
      _
    $region49: #{decoder_forward.1} parent=1 // pred_fallthru
      _
    // Predicated region
    $region50: #{decoder_forward.1} parent=1 // pred_check
      _
    $region51: #{decoder_forward.1} parent=1 // pred_check_branch
      %1117 = sbr.rel (0) target = $region53
    $region52: #{decoder_forward.1} parent=1 // pred_region
      %1118 = dma.done [#allocation6], 32
    $region53: #{decoder_forward.1} parent=1 // pred_fallthru
      _
    // Predicated region
    $region54: #{decoder_forward.1} parent=1 // pred_check
      _
    $region55: #{decoder_forward.1} parent=1 // pred_check_branch
      %1120 = sbr.rel (0) target = $region57
    $region56: #{decoder_forward.1} parent=1 // pred_region
      %1121 = dma.done [#allocation8], 32
    $region57: #{decoder_forward.1} parent=1 // pred_fallthru
      _
    %1122 = vsyncpa [#allocation6], 1
    %1123 = vsyncpa [#allocation8], 1

</llo_original>
